<compile_context>
chip_gen: v6e
topology: v6e:2x2x1
jax: 0.10.0
libtpu: 0.0.40
codegen_flags: <defaults>
</compile_context>

<pallas_src>
import math
import jax
import jax.numpy as jnp
from jax.experimental import pallas as pl
from jax.experimental.pallas import tpu as pltpu  # imported for TPU builds (no grid tuning needed here)

# ---------------- problem sizes (small, consistent with the module) ----------
B = 2            # batch
S = 8            # sequence length
D_MODEL = 32     # d_model
NUM_HEADS = 4
D_HEAD = D_MODEL // NUM_HEADS
D_FF = 64        # d_ff (divisible by d_model)
LN_EPS = 1e-5
SCALE = math.sqrt(D_MODEL)   # reference divides by sqrt(d_model), NOT sqrt(d_head)
NEG_FILL = float(jnp.finfo(jnp.float32).min)
BS = B * S       # folded batch*sequence rows


# ---------------------------- Pallas kernel ----------------------------------
def encoder_layer_kernel(x_ref, addmask_ref, ln_ref,
                         wqkv_ref, bqkv_ref, wo_ref, bo_ref,
                         w1_ref, b1_ref, w2_ref, b2_ref,
                         out_ref):
    x = x_ref[...]                       # (BS, D)
    addmask = addmask_ref[...]           # (BS, BS): 0 = keep, finfo.min = masked
    lnp = ln_ref[...]                    # (4, D): rows = [g1, b1, g2, b2]
    wo = wo_ref[...]                     # (D, D)

    def layernorm(v, g, b):
        mu = jnp.mean(v, axis=-1, keepdims=True)
        c = v - mu
        var = jnp.mean(c * c, axis=-1, keepdims=True)
        return c * jax.lax.rsqrt(var + LN_EPS) * g + b

    # ---- sublayer 1: pre-norm multi-head self-attention + residual ----------
    xn = layernorm(x, lnp[0:1, :], lnp[1:2, :])
    # fused QKV projection: (BS, D) @ (D, 3D) -> (BS, 3D); scale already in wq/bq
    qkv = jnp.dot(xn, wqkv_ref[...], preferred_element_type=jnp.float32) + bqkv_ref[...]

    attn = bo_ref[...]                   # (1, D); broadcasts when heads accumulate
    for h in range(NUM_HEADS):           # static unrolled loop over heads
        qh = qkv[:, h * D_HEAD:(h + 1) * D_HEAD]                             # (BS, dh)
        kh = qkv[:, D_MODEL + h * D_HEAD:D_MODEL + (h + 1) * D_HEAD]         # (BS, dh)
        vh = qkv[:, 2 * D_MODEL + h * D_HEAD:2 * D_MODEL + (h + 1) * D_HEAD] # (BS, dh)
        # scores = qh @ kh^T without materializing a transpose
        scores = jax.lax.dot_general(qh, kh, (((1,), (1,)), ((), ())),
                                     preferred_element_type=jnp.float32)     # (BS, BS)
        scores = scores + addmask
        m = jnp.max(scores, axis=-1, keepdims=True)
        e = jnp.exp(scores - m)
        w = e / jnp.sum(e, axis=-1, keepdims=True)
        oh = jnp.dot(w, vh, preferred_element_type=jnp.float32)              # (BS, dh)
        # accumulate head directly into the output projection (no concat)
        attn = attn + jnp.dot(oh, wo[h * D_HEAD:(h + 1) * D_HEAD, :],
                              preferred_element_type=jnp.float32)
    x = x + attn                          # attention dropout = identity (eval)

    # ---- sublayer 2: pre-norm feed-forward (ReLU) + residual -----------------
    xn = layernorm(x, lnp[2:3, :], lnp[3:4, :])
    h1 = jnp.maximum(
        jnp.dot(xn, w1_ref[...], preferred_element_type=jnp.float32) + b1_ref[...], 0.0)
    ff = jnp.dot(h1, w2_ref[...], preferred_element_type=jnp.float32) + b2_ref[...]
    out_ref[...] = x + ff                 # ffn/output dropout = identity (eval)


# ------------------------------ wrapper ---------------------------------------
def encoder_layer(x, mask, params):
    """x: (B, S, D) f32, mask: (B, S, S) float {0,1}; 0 = masked position."""
    x2d = x.reshape(BS, D_MODEL)

    # Block-diagonal additive mask: within-batch entries are 0 (keep) or
    # finfo.min (masked, matching masked_fill); cross-batch entries are
    # finfo.min so the folded-batch attention never mixes batch items.
    addmask = jnp.full((BS, BS), NEG_FILL, dtype=jnp.float32)
    for b in range(B):
        blk = jnp.where(mask[b] == 0, NEG_FILL, 0.0).astype(jnp.float32)
        addmask = addmask.at[b * S:(b + 1) * S, b * S:(b + 1) * S].set(blk)

    inv_scale = jnp.float32(1.0 / SCALE)
    wqkv = jnp.concatenate(
        [params["wq"] * inv_scale, params["wk"], params["wv"]], axis=1)      # (D, 3D)
    bqkv = jnp.concatenate(
        [params["bq"] * inv_scale, params["bk"], params["bv"]], axis=1)      # (1, 3D)
    lnp = jnp.concatenate(
        [params["ln1_g"], params["ln1_b"], params["ln2_g"], params["ln2_b"]],
        axis=0)                                                              # (4, D)

    out2d = pl.pallas_call(
        encoder_layer_kernel,
        out_shape=jax.ShapeDtypeStruct((BS, D_MODEL), jnp.float32),
        # no grid: a single invocation; every (tiny) operand lives whole in VMEM
    )(x2d, addmask, lnp, wqkv, bqkv,
      params["wo"], params["bo"],
      params["w1"], params["b1"], params["w2"], params["b2"])
    return out2d.reshape(B, S, D_MODEL)


# ------------------------- pure-JAX reference ---------------------------------
def reference(x, mask, p):
    def ln(v, g, b):
        mu = jnp.mean(v, -1, keepdims=True)
        var = jnp.mean((v - mu) ** 2, -1, keepdims=True)
        return (v - mu) / jnp.sqrt(var + LN_EPS) * g[0] + b[0]

    def mha(q_in, k_in, v_in, m):
        Bq, Sq, _ = q_in.shape
        Sk = k_in.shape[1]
        q = (q_in @ p["wq"] + p["bq"][0]).reshape(Bq, Sq, NUM_HEADS, D_HEAD).transpose(0, 2, 1, 3)
        k = (k_in @ p["wk"] + p["bk"][0]).reshape(Bq, Sk, NUM_HEADS, D_HEAD).transpose(0, 2, 1, 3)
        v = (v_in @ p["wv"] + p["bv"][0]).reshape(Bq, Sk, NUM_HEADS, D_HEAD).transpose(0, 2, 1, 3)
        scores = jnp.einsum("bhqd,bhkd->bhqk", q, k) / SCALE
        scores = jnp.where(m[:, None] == 0, NEG_FILL, scores)
        w = jax.nn.softmax(scores, -1)
        o = jnp.einsum("bhqk,bhkd->bhqd", w, v).transpose(0, 2, 1, 3).reshape(Bq, Sq, D_MODEL)
        return o @ p["wo"] + p["bo"][0]

    xn = ln(x, p["ln1_g"], p["ln1_b"])
    x = x + mha(xn, xn, xn, mask)
    xn = ln(x, p["ln2_g"], p["ln2_b"])
    ff = jnp.maximum(xn @ p["w1"] + p["b1"][0], 0.0) @ p["w2"] + p["b2"][0]
    return x + ff


# ------------------------------- main ------------------------------------------
if __name__ == "__main__":
    key = jax.random.PRNGKey(0)
    keys = iter(jax.random.split(key, 32))

    def init(shape, scale=0.05):
        return (scale * jax.random.normal(next(keys), shape)).astype(jnp.float32)

    params = {
        "ln1_g": jnp.ones((1, D_MODEL), jnp.float32),
        "ln1_b": jnp.zeros((1, D_MODEL), jnp.float32),
        "ln2_g": jnp.ones((1, D_MODEL), jnp.float32),
        "ln2_b": jnp.zeros((1, D_MODEL), jnp.float32),
    }
    for nm in ("q", "k", "v", "o"):
        params[f"w{nm}"] = init((D_MODEL, D_MODEL))
        params[f"b{nm}"] = init((1, D_MODEL))
    params["w1"] = init((D_MODEL, D_FF)); params["b1"] = init((1, D_FF))
    params["w2"] = init((D_FF, D_MODEL)); params["b2"] = init((1, D_MODEL))

    x = init((B, S, D_MODEL), scale=1.0)
    # key-padding mask: batch 0 attends to all 8 keys, batch 1 only to the first 6
    lengths = jnp.array([8, 6], dtype=jnp.int32)
    key_valid = (jnp.arange(S)[None, :] < lengths[:, None]).astype(jnp.float32)  # (B, S)
    mask = jnp.broadcast_to(key_valid[:, None, :], (B, S, S))

    out = encoder_layer(x, mask, params)
    out = jax.block_until_ready(out)

    ref = reference(x, mask, params)
    assert out.shape == (B, S, D_MODEL)
    assert jnp.allclose(out, ref, atol=1e-4, rtol=1e-4), "mismatch vs reference"

    print("KERNEL_OK")
</pallas_src>

<mosaic_0001>
module attributes {stable_mosaic.version = 11 : i64} {
  func.func @encoder_layer_kernel(%arg0: memref<16x32xf32, #tpu.memory_space<vmem>>, %arg1: memref<16x16xf32, #tpu.memory_space<vmem>>, %arg2: memref<4x32xf32, #tpu.memory_space<vmem>>, %arg3: memref<32x96xf32, #tpu.memory_space<vmem>>, %arg4: memref<1x96xf32, #tpu.memory_space<vmem>>, %arg5: memref<32x32xf32, #tpu.memory_space<vmem>>, %arg6: memref<1x32xf32, #tpu.memory_space<vmem>>, %arg7: memref<32x64xf32, #tpu.memory_space<vmem>>, %arg8: memref<1x64xf32, #tpu.memory_space<vmem>>, %arg9: memref<64x32xf32, #tpu.memory_space<vmem>>, %arg10: memref<1x32xf32, #tpu.memory_space<vmem>>, %arg11: memref<16x32xf32, #tpu.memory_space<vmem>>) attributes {dimension_semantics = [], scalar_prefetch = 0 : i64, scratch_operands = 0 : i64, tpu.core_type = #tpu.core_type<tc>} {
    %c0 = arith.constant 0 : index
    %c0_0 = arith.constant 0 : index
    %0 = vector.load %arg0[%c0, %c0_0] : memref<16x32xf32, #tpu.memory_space<vmem>>, vector<16x32xf32>
    %c0_1 = arith.constant 0 : index
    %c0_2 = arith.constant 0 : index
    %1 = vector.load %arg1[%c0_1, %c0_2] : memref<16x16xf32, #tpu.memory_space<vmem>>, vector<16x16xf32>
    %c0_3 = arith.constant 0 : index
    %c0_4 = arith.constant 0 : index
    %2 = vector.load %arg2[%c0_3, %c0_4] : memref<4x32xf32, #tpu.memory_space<vmem>>, vector<4x32xf32>
    %c0_5 = arith.constant 0 : index
    %c0_6 = arith.constant 0 : index
    %3 = vector.load %arg5[%c0_5, %c0_6] : memref<32x32xf32, #tpu.memory_space<vmem>>, vector<32x32xf32>
    %4 = vector.extract_strided_slice %2 {offsets = [0, 0], sizes = [1, 32], strides = [1, 1]} : vector<4x32xf32> to vector<1x32xf32>
    %5 = vector.extract_strided_slice %2 {offsets = [1, 0], sizes = [1, 32], strides = [1, 1]} : vector<4x32xf32> to vector<1x32xf32>
    %cst = arith.constant dense<0.000000e+00> : vector<16xf32>
    %6 = vector.multi_reduction <add>, %0, %cst [1] : vector<16x32xf32> to vector<16xf32>
    %7 = vector.shape_cast %6 : vector<16xf32> to vector<16x1xf32>
    %cst_7 = arith.constant 3.200000e+01 : f32
    %8 = vector.broadcast %cst_7 : f32 to vector<16x1xf32>
    %9 = arith.divf %7, %8 : vector<16x1xf32>
    %10 = vector.broadcast %9 : vector<16x1xf32> to vector<16x32xf32>
    %11 = arith.subf %0, %10 : vector<16x32xf32>
    %12 = arith.mulf %11, %11 : vector<16x32xf32>
    %cst_8 = arith.constant dense<0.000000e+00> : vector<16xf32>
    %13 = vector.multi_reduction <add>, %12, %cst_8 [1] : vector<16x32xf32> to vector<16xf32>
    %14 = vector.shape_cast %13 : vector<16xf32> to vector<16x1xf32>
    %cst_9 = arith.constant 3.200000e+01 : f32
    %15 = vector.broadcast %cst_9 : f32 to vector<16x1xf32>
    %16 = arith.divf %14, %15 : vector<16x1xf32>
    %cst_10 = arith.constant 9.99999974E-6 : f32
    %17 = vector.broadcast %cst_10 : f32 to vector<16x1xf32>
    %18 = arith.addf %16, %17 : vector<16x1xf32>
    %19 = math.rsqrt %18 : vector<16x1xf32>
    %20 = vector.broadcast %19 : vector<16x1xf32> to vector<16x32xf32>
    %21 = arith.mulf %11, %20 : vector<16x32xf32>
    %22 = vector.broadcast %4 : vector<1x32xf32> to vector<16x32xf32>
    %23 = arith.mulf %21, %22 : vector<16x32xf32>
    %24 = vector.broadcast %5 : vector<1x32xf32> to vector<16x32xf32>
    %25 = arith.addf %23, %24 : vector<16x32xf32>
    %c0_11 = arith.constant 0 : index
    %c0_12 = arith.constant 0 : index
    %26 = vector.load %arg3[%c0_11, %c0_12] : memref<32x96xf32, #tpu.memory_space<vmem>>, vector<32x96xf32>
    %cst_13 = arith.constant dense<0.000000e+00> : vector<16x96xf32>
    %27 = tpu.matmul %25, %26, %cst_13 {dimension_numbers = #tpu.dot_dimension_numbers<[1], [0], [0], [1], [0, 0, 1, 1], [], []>} : vector<16x32xf32>, vector<32x96xf32>, vector<16x96xf32> -> vector<16x96xf32>
    %c0_14 = arith.constant 0 : index
    %c0_15 = arith.constant 0 : index
    %28 = vector.load %arg4[%c0_14, %c0_15] : memref<1x96xf32, #tpu.memory_space<vmem>>, vector<1x96xf32>
    %29 = vector.broadcast %28 : vector<1x96xf32> to vector<16x96xf32>
    %30 = arith.addf %27, %29 : vector<16x96xf32>
    %c0_16 = arith.constant 0 : index
    %c0_17 = arith.constant 0 : index
    %31 = vector.load %arg6[%c0_16, %c0_17] : memref<1x32xf32, #tpu.memory_space<vmem>>, vector<1x32xf32>
    %32 = vector.extract_strided_slice %30 {offsets = [0, 0], sizes = [16, 8], strides = [1, 1]} : vector<16x96xf32> to vector<16x8xf32>
    %33 = vector.extract_strided_slice %30 {offsets = [0, 32], sizes = [16, 8], strides = [1, 1]} : vector<16x96xf32> to vector<16x8xf32>
    %34 = vector.extract_strided_slice %30 {offsets = [0, 64], sizes = [16, 8], strides = [1, 1]} : vector<16x96xf32> to vector<16x8xf32>
    %cst_18 = arith.constant dense<0.000000e+00> : vector<16x16xf32>
    %35 = tpu.matmul %32, %33, %cst_18 {dimension_numbers = #tpu.dot_dimension_numbers<[1], [1], [0], [0], [0, 0, 1, 0], [], []>} : vector<16x8xf32>, vector<16x8xf32>, vector<16x16xf32> -> vector<16x16xf32>
    %36 = arith.addf %35, %1 : vector<16x16xf32>
    %cst_19 = arith.constant dense<0xFF800000> : vector<16xf32>
    %37 = vector.multi_reduction <maximumf>, %36, %cst_19 [1] : vector<16x16xf32> to vector<16xf32>
    %38 = vector.shape_cast %37 : vector<16xf32> to vector<16x1xf32>
    %39 = vector.broadcast %38 : vector<16x1xf32> to vector<16x16xf32>
    %40 = arith.subf %36, %39 : vector<16x16xf32>
    %41 = math.exp %40 : vector<16x16xf32>
    %cst_20 = arith.constant dense<0.000000e+00> : vector<16xf32>
    %42 = vector.multi_reduction <add>, %41, %cst_20 [1] : vector<16x16xf32> to vector<16xf32>
    %43 = vector.shape_cast %42 : vector<16xf32> to vector<16x1xf32>
    %44 = vector.broadcast %43 : vector<16x1xf32> to vector<16x16xf32>
    %45 = arith.divf %41, %44 : vector<16x16xf32>
    %cst_21 = arith.constant dense<0.000000e+00> : vector<16x8xf32>
    %46 = tpu.matmul %45, %34, %cst_21 {dimension_numbers = #tpu.dot_dimension_numbers<[1], [0], [0], [1], [0, 0, 1, 1], [], []>} : vector<16x16xf32>, vector<16x8xf32>, vector<16x8xf32> -> vector<16x8xf32>
    %47 = vector.extract_strided_slice %3 {offsets = [0, 0], sizes = [8, 32], strides = [1, 1]} : vector<32x32xf32> to vector<8x32xf32>
    %cst_22 = arith.constant dense<0.000000e+00> : vector<16x32xf32>
    %48 = tpu.matmul %46, %47, %cst_22 {dimension_numbers = #tpu.dot_dimension_numbers<[1], [0], [0], [1], [0, 0, 1, 1], [], []>} : vector<16x8xf32>, vector<8x32xf32>, vector<16x32xf32> -> vector<16x32xf32>
    %49 = vector.broadcast %31 : vector<1x32xf32> to vector<16x32xf32>
    %50 = arith.addf %49, %48 : vector<16x32xf32>
    %51 = vector.extract_strided_slice %30 {offsets = [0, 8], sizes = [16, 8], strides = [1, 1]} : vector<16x96xf32> to vector<16x8xf32>
    %52 = vector.extract_strided_slice %30 {offsets = [0, 40], sizes = [16, 8], strides = [1, 1]} : vector<16x96xf32> to vector<16x8xf32>
    %53 = vector.extract_strided_slice %30 {offsets = [0, 72], sizes = [16, 8], strides = [1, 1]} : vector<16x96xf32> to vector<16x8xf32>
    %cst_23 = arith.constant dense<0.000000e+00> : vector<16x16xf32>
    %54 = tpu.matmul %51, %52, %cst_23 {dimension_numbers = #tpu.dot_dimension_numbers<[1], [1], [0], [0], [0, 0, 1, 0], [], []>} : vector<16x8xf32>, vector<16x8xf32>, vector<16x16xf32> -> vector<16x16xf32>
    %55 = arith.addf %54, %1 : vector<16x16xf32>
    %cst_24 = arith.constant dense<0xFF800000> : vector<16xf32>
    %56 = vector.multi_reduction <maximumf>, %55, %cst_24 [1] : vector<16x16xf32> to vector<16xf32>
    %57 = vector.shape_cast %56 : vector<16xf32> to vector<16x1xf32>
    %58 = vector.broadcast %57 : vector<16x1xf32> to vector<16x16xf32>
    %59 = arith.subf %55, %58 : vector<16x16xf32>
    %60 = math.exp %59 : vector<16x16xf32>
    %cst_25 = arith.constant dense<0.000000e+00> : vector<16xf32>
    %61 = vector.multi_reduction <add>, %60, %cst_25 [1] : vector<16x16xf32> to vector<16xf32>
    %62 = vector.shape_cast %61 : vector<16xf32> to vector<16x1xf32>
    %63 = vector.broadcast %62 : vector<16x1xf32> to vector<16x16xf32>
    %64 = arith.divf %60, %63 : vector<16x16xf32>
    %cst_26 = arith.constant dense<0.000000e+00> : vector<16x8xf32>
    %65 = tpu.matmul %64, %53, %cst_26 {dimension_numbers = #tpu.dot_dimension_numbers<[1], [0], [0], [1], [0, 0, 1, 1], [], []>} : vector<16x16xf32>, vector<16x8xf32>, vector<16x8xf32> -> vector<16x8xf32>
    %66 = vector.extract_strided_slice %3 {offsets = [8, 0], sizes = [8, 32], strides = [1, 1]} : vector<32x32xf32> to vector<8x32xf32>
    %cst_27 = arith.constant dense<0.000000e+00> : vector<16x32xf32>
    %67 = tpu.matmul %65, %66, %cst_27 {dimension_numbers = #tpu.dot_dimension_numbers<[1], [0], [0], [1], [0, 0, 1, 1], [], []>} : vector<16x8xf32>, vector<8x32xf32>, vector<16x32xf32> -> vector<16x32xf32>
    %68 = arith.addf %50, %67 : vector<16x32xf32>
    %69 = vector.extract_strided_slice %30 {offsets = [0, 16], sizes = [16, 8], strides = [1, 1]} : vector<16x96xf32> to vector<16x8xf32>
    %70 = vector.extract_strided_slice %30 {offsets = [0, 48], sizes = [16, 8], strides = [1, 1]} : vector<16x96xf32> to vector<16x8xf32>
    %71 = vector.extract_strided_slice %30 {offsets = [0, 80], sizes = [16, 8], strides = [1, 1]} : vector<16x96xf32> to vector<16x8xf32>
    %cst_28 = arith.constant dense<0.000000e+00> : vector<16x16xf32>
    %72 = tpu.matmul %69, %70, %cst_28 {dimension_numbers = #tpu.dot_dimension_numbers<[1], [1], [0], [0], [0, 0, 1, 0], [], []>} : vector<16x8xf32>, vector<16x8xf32>, vector<16x16xf32> -> vector<16x16xf32>
    %73 = arith.addf %72, %1 : vector<16x16xf32>
    %cst_29 = arith.constant dense<0xFF800000> : vector<16xf32>
    %74 = vector.multi_reduction <maximumf>, %73, %cst_29 [1] : vector<16x16xf32> to vector<16xf32>
    %75 = vector.shape_cast %74 : vector<16xf32> to vector<16x1xf32>
    %76 = vector.broadcast %75 : vector<16x1xf32> to vector<16x16xf32>
    %77 = arith.subf %73, %76 : vector<16x16xf32>
    %78 = math.exp %77 : vector<16x16xf32>
    %cst_30 = arith.constant dense<0.000000e+00> : vector<16xf32>
    %79 = vector.multi_reduction <add>, %78, %cst_30 [1] : vector<16x16xf32> to vector<16xf32>
    %80 = vector.shape_cast %79 : vector<16xf32> to vector<16x1xf32>
    %81 = vector.broadcast %80 : vector<16x1xf32> to vector<16x16xf32>
    %82 = arith.divf %78, %81 : vector<16x16xf32>
    %cst_31 = arith.constant dense<0.000000e+00> : vector<16x8xf32>
    %83 = tpu.matmul %82, %71, %cst_31 {dimension_numbers = #tpu.dot_dimension_numbers<[1], [0], [0], [1], [0, 0, 1, 1], [], []>} : vector<16x16xf32>, vector<16x8xf32>, vector<16x8xf32> -> vector<16x8xf32>
    %84 = vector.extract_strided_slice %3 {offsets = [16, 0], sizes = [8, 32], strides = [1, 1]} : vector<32x32xf32> to vector<8x32xf32>
    %cst_32 = arith.constant dense<0.000000e+00> : vector<16x32xf32>
    %85 = tpu.matmul %83, %84, %cst_32 {dimension_numbers = #tpu.dot_dimension_numbers<[1], [0], [0], [1], [0, 0, 1, 1], [], []>} : vector<16x8xf32>, vector<8x32xf32>, vector<16x32xf32> -> vector<16x32xf32>
    %86 = arith.addf %68, %85 : vector<16x32xf32>
    %87 = vector.extract_strided_slice %30 {offsets = [0, 24], sizes = [16, 8], strides = [1, 1]} : vector<16x96xf32> to vector<16x8xf32>
    %88 = vector.extract_strided_slice %30 {offsets = [0, 56], sizes = [16, 8], strides = [1, 1]} : vector<16x96xf32> to vector<16x8xf32>
    %89 = vector.extract_strided_slice %30 {offsets = [0, 88], sizes = [16, 8], strides = [1, 1]} : vector<16x96xf32> to vector<16x8xf32>
    %cst_33 = arith.constant dense<0.000000e+00> : vector<16x16xf32>
    %90 = tpu.matmul %87, %88, %cst_33 {dimension_numbers = #tpu.dot_dimension_numbers<[1], [1], [0], [0], [0, 0, 1, 0], [], []>} : vector<16x8xf32>, vector<16x8xf32>, vector<16x16xf32> -> vector<16x16xf32>
    %91 = arith.addf %90, %1 : vector<16x16xf32>
    %cst_34 = arith.constant dense<0xFF800000> : vector<16xf32>
    %92 = vector.multi_reduction <maximumf>, %91, %cst_34 [1] : vector<16x16xf32> to vector<16xf32>
    %93 = vector.shape_cast %92 : vector<16xf32> to vector<16x1xf32>
    %94 = vector.broadcast %93 : vector<16x1xf32> to vector<16x16xf32>
    %95 = arith.subf %91, %94 : vector<16x16xf32>
    %96 = math.exp %95 : vector<16x16xf32>
    %cst_35 = arith.constant dense<0.000000e+00> : vector<16xf32>
    %97 = vector.multi_reduction <add>, %96, %cst_35 [1] : vector<16x16xf32> to vector<16xf32>
    %98 = vector.shape_cast %97 : vector<16xf32> to vector<16x1xf32>
    %99 = vector.broadcast %98 : vector<16x1xf32> to vector<16x16xf32>
    %100 = arith.divf %96, %99 : vector<16x16xf32>
    %cst_36 = arith.constant dense<0.000000e+00> : vector<16x8xf32>
    %101 = tpu.matmul %100, %89, %cst_36 {dimension_numbers = #tpu.dot_dimension_numbers<[1], [0], [0], [1], [0, 0, 1, 1], [], []>} : vector<16x16xf32>, vector<16x8xf32>, vector<16x8xf32> -> vector<16x8xf32>
    %102 = vector.extract_strided_slice %3 {offsets = [24, 0], sizes = [8, 32], strides = [1, 1]} : vector<32x32xf32> to vector<8x32xf32>
    %cst_37 = arith.constant dense<0.000000e+00> : vector<16x32xf32>
    %103 = tpu.matmul %101, %102, %cst_37 {dimension_numbers = #tpu.dot_dimension_numbers<[1], [0], [0], [1], [0, 0, 1, 1], [], []>} : vector<16x8xf32>, vector<8x32xf32>, vector<16x32xf32> -> vector<16x32xf32>
    %104 = arith.addf %86, %103 : vector<16x32xf32>
    %105 = arith.addf %0, %104 : vector<16x32xf32>
    %106 = vector.extract_strided_slice %2 {offsets = [2, 0], sizes = [1, 32], strides = [1, 1]} : vector<4x32xf32> to vector<1x32xf32>
    %107 = vector.extract_strided_slice %2 {offsets = [3, 0], sizes = [1, 32], strides = [1, 1]} : vector<4x32xf32> to vector<1x32xf32>
    %cst_38 = arith.constant dense<0.000000e+00> : vector<16xf32>
    %108 = vector.multi_reduction <add>, %105, %cst_38 [1] : vector<16x32xf32> to vector<16xf32>
    %109 = vector.shape_cast %108 : vector<16xf32> to vector<16x1xf32>
    %cst_39 = arith.constant 3.200000e+01 : f32
    %110 = vector.broadcast %cst_39 : f32 to vector<16x1xf32>
    %111 = arith.divf %109, %110 : vector<16x1xf32>
    %112 = vector.broadcast %111 : vector<16x1xf32> to vector<16x32xf32>
    %113 = arith.subf %105, %112 : vector<16x32xf32>
    %114 = arith.mulf %113, %113 : vector<16x32xf32>
    %cst_40 = arith.constant dense<0.000000e+00> : vector<16xf32>
    %115 = vector.multi_reduction <add>, %114, %cst_40 [1] : vector<16x32xf32> to vector<16xf32>
    %116 = vector.shape_cast %115 : vector<16xf32> to vector<16x1xf32>
    %cst_41 = arith.constant 3.200000e+01 : f32
    %117 = vector.broadcast %cst_41 : f32 to vector<16x1xf32>
    %118 = arith.divf %116, %117 : vector<16x1xf32>
    %cst_42 = arith.constant 9.99999974E-6 : f32
    %119 = vector.broadcast %cst_42 : f32 to vector<16x1xf32>
    %120 = arith.addf %118, %119 : vector<16x1xf32>
    %121 = math.rsqrt %120 : vector<16x1xf32>
    %122 = vector.broadcast %121 : vector<16x1xf32> to vector<16x32xf32>
    %123 = arith.mulf %113, %122 : vector<16x32xf32>
    %124 = vector.broadcast %106 : vector<1x32xf32> to vector<16x32xf32>
    %125 = arith.mulf %123, %124 : vector<16x32xf32>
    %126 = vector.broadcast %107 : vector<1x32xf32> to vector<16x32xf32>
    %127 = arith.addf %125, %126 : vector<16x32xf32>
    %c0_43 = arith.constant 0 : index
    %c0_44 = arith.constant 0 : index
    %128 = vector.load %arg7[%c0_43, %c0_44] : memref<32x64xf32, #tpu.memory_space<vmem>>, vector<32x64xf32>
    %cst_45 = arith.constant dense<0.000000e+00> : vector<16x64xf32>
    %129 = tpu.matmul %127, %128, %cst_45 {dimension_numbers = #tpu.dot_dimension_numbers<[1], [0], [0], [1], [0, 0, 1, 1], [], []>} : vector<16x32xf32>, vector<32x64xf32>, vector<16x64xf32> -> vector<16x64xf32>
    %c0_46 = arith.constant 0 : index
    %c0_47 = arith.constant 0 : index
    %130 = vector.load %arg8[%c0_46, %c0_47] : memref<1x64xf32, #tpu.memory_space<vmem>>, vector<1x64xf32>
    %131 = vector.broadcast %130 : vector<1x64xf32> to vector<16x64xf32>
    %132 = arith.addf %129, %131 : vector<16x64xf32>
    %cst_48 = arith.constant 0.000000e+00 : f32
    %133 = vector.broadcast %cst_48 : f32 to vector<16x64xf32>
    %134 = arith.maximumf %132, %133 : vector<16x64xf32>
    %c0_49 = arith.constant 0 : index
    %c0_50 = arith.constant 0 : index
    %135 = vector.load %arg9[%c0_49, %c0_50] : memref<64x32xf32, #tpu.memory_space<vmem>>, vector<64x32xf32>
    %cst_51 = arith.constant dense<0.000000e+00> : vector<16x32xf32>
    %136 = tpu.matmul %134, %135, %cst_51 {dimension_numbers = #tpu.dot_dimension_numbers<[1], [0], [0], [1], [0, 0, 1, 1], [], []>} : vector<16x64xf32>, vector<64x32xf32>, vector<16x32xf32> -> vector<16x32xf32>
    %c0_52 = arith.constant 0 : index
    %c0_53 = arith.constant 0 : index
    %137 = vector.load %arg10[%c0_52, %c0_53] : memref<1x32xf32, #tpu.memory_space<vmem>>, vector<1x32xf32>
    %138 = vector.broadcast %137 : vector<1x32xf32> to vector<16x32xf32>
    %139 = arith.addf %136, %138 : vector<16x32xf32>
    %140 = arith.addf %105, %139 : vector<16x32xf32>
    %c0_54 = arith.constant 0 : index
    %c0_55 = arith.constant 0 : index
    %141 = vector.load %arg11[%c0_54, %c0_55] : memref<16x32xf32, #tpu.memory_space<vmem>>, vector<16x32xf32>
    tpu.vector_store %arg11[%c0_54, %c0_55], %140 {strides = array<i32>} : memref<16x32xf32, #tpu.memory_space<vmem>>, vector<16x32xf32>,
    return
  }
}

</mosaic_0001>

<llo_original>
// kernel: tpu_custom_call.1
$region0: #{tpu_custom_call.1}
  #allocation0 [shape = 'u32[]', space=smem, size = 0x4, offset = 0x4, fixed_abs, tag = 'smem constant byte address 0x4 - core index']
  #allocation1 [shape = 'u32[144,128]{1,0:T(1,128)}', space=vmem, size = 0x12000, scoped, tag = 'internal scratch']
  %s0 = inlined_call_operand.hbm [shape: f32[16,32], index: 0, kind: input, shape index: {}]
  %s1 = inlined_call_operand.hbm [shape: f32[16,16], index: 1, kind: input, shape index: {}]
  %s2 = inlined_call_operand.hbm [shape: f32[4,32], index: 2, kind: input, shape index: {}]
  %s3 = inlined_call_operand.vmem [shape: f32[32,96], index: 3, kind: input, shape index: {}]
  %s4 = inlined_call_operand.vmem [shape: f32[1,96], index: 4, kind: input, shape index: {}]
  %s5 = inlined_call_operand.vmem [shape: f32[32,32], index: 5, kind: input, shape index: {}]
  %s6 = inlined_call_operand.vmem [shape: f32[1,32], index: 6, kind: input, shape index: {}]
  %s7 = inlined_call_operand.vmem [shape: f32[32,64], index: 7, kind: input, shape index: {}]
  %s8 = inlined_call_operand.vmem [shape: f32[1,64], index: 8, kind: input, shape index: {}]
  %s9 = inlined_call_operand.vmem [shape: f32[64,32], index: 9, kind: input, shape index: {}]
  %s10 = inlined_call_operand.vmem [shape: f32[1,32], index: 10, kind: input, shape index: {}]
  %s11 = inlined_call_operand.hbm [shape: f32[16,32], index: 11, kind: output, shape index: {}]
  %s12 = sld [smem:[#allocation0]]
  $region66: #{tpu_custom_call.1} parent=0
    _
  %s14 = ssub.s32 1, %s12
  %s15 = scalar_select 0, %s14, %s12
  $region1: #{tpu_custom_call.1} parent=0
    #allocation2 [shape = 'u8[8192]{0}', space=vmem, size = 0x2000, scoped, tag = 'input window, operand 0, single buffered']
    #allocation3 [shape = 's32[1]{0}', space=sflag, size = 0x4, scoped, tag = 'scoped memory for tpu_custom_call.1']
    #allocation4 [shape = 's32[1]{0}', space=sflag, size = 0x4, scoped, tag = 'scoped memory for tpu_custom_call.1']
    #allocation5 [shape = 'u8[8192]{0}', space=vmem, size = 0x2000, scoped, tag = 'input window, operand 1, single buffered']
    #allocation6 [shape = 's32[1]{0}', space=sflag, size = 0x4, scoped, tag = 'scoped memory for tpu_custom_call.1']
    #allocation7 [shape = 'u8[2048]{0}', space=vmem, size = 0x800, scoped, tag = 'input window, operand 2, single buffered']
    #allocation8 [shape = 'u8[8192]{0}', space=vmem, size = 0x2000, scoped, tag = 'output window, operand 0, single buffered']
    %16 = vsyncpa [#allocation3], 0
    %17 = vsyncpa [#allocation6], 0
    %18 = vsyncpa [#allocation4], 0
    // Predicated region
    $region2: #{tpu_custom_call.1} parent=1 // pred_check
      _
    $region3: #{tpu_custom_call.1} parent=1 // pred_check_branch
      %20 = sbr.rel (0) target = $region5
    $region4: #{tpu_custom_call.1} parent=1 // pred_region
      %s22 = ssub.s32 256, 256
      %23 = vsyncadd [#allocation3], %s22
      %s24 = sshll.u32 [#allocation2], 4
      %s25 = int_to_ptr.vmem [resolvable:$true] %s24
      %30 = dma.hbm_to_vmem [thread:$0]  %s0, 256, %s25, [#allocation3], 128, 128, 8
    $region5: #{tpu_custom_call.1} parent=1 // pred_fallthru
      _
    // Predicated region
    $region6: #{tpu_custom_call.1} parent=1 // pred_check
      _
    $region7: #{tpu_custom_call.1} parent=1 // pred_check_branch
      %32 = sbr.rel (0) target = $region9
    $region8: #{tpu_custom_call.1} parent=1 // pred_region
      %s34 = ssub.s32 256, 256
      %35 = vsyncadd [#allocation6], %s34
      %s36 = sshll.u32 [#allocation5], 4
      %s37 = int_to_ptr.vmem [resolvable:$true] %s36
      %42 = dma.hbm_to_vmem [thread:$0]  %s1, 256, %s37, [#allocation6], 128, 128, 8
    $region9: #{tpu_custom_call.1} parent=1 // pred_fallthru
      _
    // Predicated region
    $region10: #{tpu_custom_call.1} parent=1 // pred_check
      _
    $region11: #{tpu_custom_call.1} parent=1 // pred_check_branch
      %44 = sbr.rel (0) target = $region13
    $region12: #{tpu_custom_call.1} parent=1 // pred_region
      %s46 = ssub.s32 64, 64
      %47 = vsyncadd [#allocation6], %s46
      %s49 = sshll.u32 [#allocation7], 4
      %s50 = int_to_ptr.vmem [resolvable:$true] %s49
      %52 = dma.hbm_to_vmem [thread:$0]  %s2, 64, %s50, [#allocation6]
    $region13: #{tpu_custom_call.1} parent=1 // pred_fallthru
      _
    // Predicated region
    $region14: #{tpu_custom_call.1} parent=1 // pred_check
      _
    $region15: #{tpu_custom_call.1} parent=1 // pred_check_branch
      %54 = sbr.rel (0) target = $region17
    $region16: #{tpu_custom_call.1} parent=1 // pred_region
      _
    $region17: #{tpu_custom_call.1} parent=1 // pred_fallthru
      _
    // Predicated region
    $region18: #{tpu_custom_call.1} parent=1 // pred_check
      _
    $region19: #{tpu_custom_call.1} parent=1 // pred_check_branch
      %56 = sbr.rel (0) target = $region21
    $region20: #{tpu_custom_call.1} parent=1 // pred_region
      _
    $region21: #{tpu_custom_call.1} parent=1 // pred_fallthru
      _
    // Predicated region
    $region22: #{tpu_custom_call.1} parent=1 // pred_check
      _
    $region23: #{tpu_custom_call.1} parent=1 // pred_check_branch
      %58 = sbr.rel (0) target = $region25
    $region24: #{tpu_custom_call.1} parent=1 // pred_region
      _
    $region25: #{tpu_custom_call.1} parent=1 // pred_fallthru
      _
    // Predicated region
    $region26: #{tpu_custom_call.1} parent=1 // pred_check
      _
    $region27: #{tpu_custom_call.1} parent=1 // pred_check_branch
      %60 = sbr.rel (0) target = $region29
    $region28: #{tpu_custom_call.1} parent=1 // pred_region
      _
    $region29: #{tpu_custom_call.1} parent=1 // pred_fallthru
      _
    // Predicated region
    $region30: #{tpu_custom_call.1} parent=1 // pred_check
      _
    $region31: #{tpu_custom_call.1} parent=1 // pred_check_branch
      %62 = sbr.rel (0) target = $region33
    $region32: #{tpu_custom_call.1} parent=1 // pred_region
      _
    $region33: #{tpu_custom_call.1} parent=1 // pred_fallthru
      _
    // Predicated region
    $region34: #{tpu_custom_call.1} parent=1 // pred_check
      _
    $region35: #{tpu_custom_call.1} parent=1 // pred_check_branch
      %64 = sbr.rel (0) target = $region37
    $region36: #{tpu_custom_call.1} parent=1 // pred_region
      _
    $region37: #{tpu_custom_call.1} parent=1 // pred_fallthru
      _
    // Predicated region
    $region38: #{tpu_custom_call.1} parent=1 // pred_check
      _
    $region39: #{tpu_custom_call.1} parent=1 // pred_check_branch
      %66 = sbr.rel (0) target = $region41
    $region40: #{tpu_custom_call.1} parent=1 // pred_region
      _
    $region41: #{tpu_custom_call.1} parent=1 // pred_fallthru
      _
    // Predicated region
    $region42: #{tpu_custom_call.1} parent=1 // pred_check
      _
    $region43: #{tpu_custom_call.1} parent=1 // pred_check_branch
      %68 = sbr.rel (0) target = $region45
    $region44: #{tpu_custom_call.1} parent=1 // pred_region
      _
    $region45: #{tpu_custom_call.1} parent=1 // pred_fallthru
      _
    // Predicated region
    $region46: #{tpu_custom_call.1} parent=1 // pred_check
      _
    $region47: #{tpu_custom_call.1} parent=1 // pred_check_branch
      %70 = sbr.rel (0) target = $region49
    $region48: #{tpu_custom_call.1} parent=1 // pred_region
      %71 = dma.done [#allocation3], 256
    $region49: #{tpu_custom_call.1} parent=1 // pred_fallthru
      _
    // Predicated region
    $region50: #{tpu_custom_call.1} parent=1 // pred_check
      _
    $region51: #{tpu_custom_call.1} parent=1 // pred_check_branch
      %73 = sbr.rel (0) target = $region53
    $region52: #{tpu_custom_call.1} parent=1 // pred_region
      %74 = dma.done [#allocation6], 256
    $region53: #{tpu_custom_call.1} parent=1 // pred_fallthru
      _
    // Predicated region
    $region54: #{tpu_custom_call.1} parent=1 // pred_check
      _
    $region55: #{tpu_custom_call.1} parent=1 // pred_check_branch
      %76 = sbr.rel (0) target = $region57
    $region56: #{tpu_custom_call.1} parent=1 // pred_region
      %77 = dma.done [#allocation6], 64
    $region57: #{tpu_custom_call.1} parent=1 // pred_fallthru
      _
    %v78 = vld [vmem:[#allocation2] sm:$0xff]
    %v79 = vld [vmem:[#allocation2 + $0x8] sm:$0xff]
    %v80 = vld [vmem:[#allocation5] sm:$0xff]
    %v81 = vld [vmem:[#allocation5 + $0x8] sm:$0xff]
    %v82 = vld [vmem:[#allocation7] sm:$0xf]
    %v83 = vld [vmem:[%s5] sm:$0xff]
    %v84 = vld [vmem:[%s5 + $0x8] sm:$0xff]
    %v85 = vld [vmem:[%s5 + $0x10] sm:$0xff]
    %v86 = vld [vmem:[%s5 + $0x18] sm:$0xff]
    %vm87 = vcmask 261120
    %v88 = vsel %vm87, %v78, 0.0
    %89 = vadd.xlane.f32.xlu0 %v88
    %v90 = vpop.xlane.xlu0 %89
    %v91 = vsel %vm87, %v79, 0.0
    %92 = vadd.xlane.f32.xlu0 %v91
    %v93 = vpop.xlane.xlu0 %92
    %v94 = vrcp.pop 32.0
    %v95 = vmul.f32 %v90, %v94
    %v96 = vmul.f32 %v93, %v94
    %v97 = vsub.f32 %v78, %v95
    %v98 = vsub.f32 %v79, %v96
    %v99 = vmul.f32 %v97, %v97
    %v100 = vmul.f32 %v98, %v98
    %v101 = vsel %vm87, %v99, 0.0
    %102 = vadd.xlane.f32.xlu0 %v101
    %v103 = vpop.xlane.xlu0 %102
    %v104 = vsel %vm87, %v100, 0.0
    %105 = vadd.xlane.f32.xlu0 %v104
    %v106 = vpop.xlane.xlu0 %105
    %v107 = vmul.f32 %v103, %v94
    %v108 = vmul.f32 %v106, %v94
    %v109 = vadd.f32 %v107, 1e-05
    %v110 = vadd.f32 %v108, 1e-05
    %v111 = vrsqrt.pop %v109
    %v112 = vrsqrt.pop %v110
    %v113 = vmul.f32 %v97, %v111
    %v114 = vmul.f32 %v98, %v112
    %v115 = vlaneseq
    %v116 = vshrl.u32 %v115, 7
    %v117 = vsub.s32 0, %v116
    %v118 = vrot.slane %v82, %v117
    %v119 = vmul.f32 %v113, %v118
    %v120 = vmul.f32 %v114, %v118
    %v121 = vlaneseq
    %v122 = vshrl.u32 %v121, 7
    %v123 = vsub.s32 1, %v122
    %v124 = vrot.slane %v82, %v123
    %v125 = vadd.f32 %v119, %v124
    %v126 = vadd.f32 %v120, %v124
    %v127 = vld [vmem:[%s3] sm:$0xff]
    %v128 = vld [vmem:[%s3 + $0x8] sm:$0xff]
    %v129 = vld [vmem:[%s3 + $0x10] sm:$0xff]
    %v130 = vld [vmem:[%s3 + $0x18] sm:$0xff]
    %v131 = vld [vmem:[%s4] sm:$0x1]
    %v133 = vlaneseq
    %v134 = vshrl.u32 %v133, 7
    %v135 = vsub.s32 0, %v134
    %v136 = vrot.slane %v131, %v135
    %v139 = vsel %vm87, %v125, 0
    %v142 = vsel %vm87, %v126, 0
    %144 = vmatprep.subr.mxu0 0.0
    %145 = vmatpush1.msra.mxu0 0.0
    %146 = vmatprep.subr.mxu0 0.0
    %147 = vmatpush1.msra.mxu0 0.0
    %148 = vmatprep.subr.mxu0 0.0
    %149 = vmatpush1.msra.mxu0 0.0
    %150 = vmatprep.subr.mxu0 0.0
    %151 = vmatpush1.msra.mxu0 0.0
    %152 = vmatprep.subr.mxu0 0.0
    %153 = vmatpush1.msra.mxu0 0.0
    %154 = vmatprep.subr.mxu0 0.0
    %155 = vmatpush1.msra.mxu0 0.0
    %156 = vmatprep.subr.mxu0 0.0
    %157 = vmatpush1.msra.mxu0 0.0
    %158 = vmatprep.subr.mxu0 0.0
    %159 = vmatpush1.msra.mxu0 0.0
    %160 = vmatprep.subr.mxu0 0.0
    %161 = vmatpush1.msra.mxu0 0.0
    %162 = vmatprep.subr.mxu0 0.0
    %163 = vmatpush1.msra.mxu0 0.0
    %164 = vmatprep.subr.mxu0 0.0
    %165 = vmatpush1.msra.mxu0 0.0
    %166 = vmatprep.subr.mxu0 0.0
    %167 = vmatpush1.msra.mxu0 0.0
    %168 = vmatprep.subr.mxu0 0.0
    %169 = vmatpush1.msra.mxu0 %v130
    %170 = vmatprep.subr.mxu0 0.0
    %171 = vmatpush1.msra.mxu0 %v129
    %172 = vmatprep.subr.mxu0 0.0
    %173 = vmatpush1.msra.mxu0 %v128
    %174 = vmatprep.subr.mxu0 0.0
    %175 = vmatpush1.msra.mxu0 %v127
    %176 = vmatprep.subr.mxu0 0.0
    %177 = vmatpush2.msra.mxu0 0.0
    %178 = vmatprep.subr.mxu0 0.0
    %179 = vmatpush2.msra.mxu0 0.0
    %180 = vmatprep.subr.mxu0 0.0
    %181 = vmatpush2.msra.mxu0 0.0
    %182 = vmatprep.subr.mxu0 0.0
    %183 = vmatpush2.msra.mxu0 0.0
    %184 = vmatprep.subr.mxu0 0.0
    %185 = vmatpush2.msra.mxu0 0.0
    %186 = vmatprep.subr.mxu0 0.0
    %187 = vmatpush2.msra.mxu0 0.0
    %188 = vmatprep.subr.mxu0 0.0
    %189 = vmatpush2.msra.mxu0 0.0
    %190 = vmatprep.subr.mxu0 0.0
    %191 = vmatpush2.msra.mxu0 0.0
    %192 = vmatprep.subr.mxu0 0.0
    %193 = vmatpush2.msra.mxu0 0.0
    %194 = vmatprep.subr.mxu0 0.0
    %195 = vmatpush2.msra.mxu0 0.0
    %196 = vmatprep.subr.mxu0 0.0
    %197 = vmatpush2.msra.mxu0 0.0
    %198 = vmatprep.subr.mxu0 0.0
    %199 = vmatpush2.msra.mxu0 0.0
    %200 = vmatprep.subr.mxu0 0.0
    %201 = vmatpush2.msra.mxu0 0.0
    %202 = vmatprep.subr.mxu0 0.0
    %203 = vmatpush2.msra.mxu0 0.0
    %204 = vmatprep.subr.mxu0 0.0
    %205 = vmatpush2.msra.mxu0 0.0
    %206 = vmatprep.subr.mxu0 0.0
    %207 = vmatpush2.msra.mxu0 0.0
    %208 = vmatprep.mubr.f32.mxu0 0.0
    %209 = vmatmul.mubr.f32.gmra.mxu0 %v139
    %v210 = vpop.f32.mrf.mxu0
    %v211 = vadd.f32 %v136, %v210
    %v212 = vpop.f32.mrf.mxu0
    %213 = vmatprep.mubr.f32.mxu0 0.0
    %214 = vmatmul.mubr.f32.gmra.mxu0 %v142
    %v215 = vpop.f32.mrf.mxu0
    %v216 = vadd.f32 %v136, %v215
    %v217 = vpop.f32.mrf.mxu0
    %218 = vdwg.mxu0
    %v219 = vld [vmem:[%s6] sm:$0x1]
    %222 = vrot.lane.b32.xlu0 %v211, 96
    %v223 = vpop.permute.xlu0 %222
    %224 = vrot.lane.b32.xlu0 %v216, 96
    %v225 = vpop.permute.xlu0 %224
    %vm226 = vcmask 64512
    %v227 = vsel %vm226, %v211, 0
    %v229 = vsel %vm226, %v216, 0
    %v231 = vsel %vm226, %v223, 0
    %v233 = vsel %vm226, %v225, 0
    %235 = vmatprep.subr.mxu0 0.0
    %236 = vmatpush1.xpose.msra.mxu0 0.0
    %237 = vmatprep.subr.mxu0 0.0
    %238 = vmatpush1.xpose.msra.mxu0 0.0
    %239 = vmatprep.subr.mxu0 0.0
    %240 = vmatpush1.xpose.msra.mxu0 0.0
    %241 = vmatprep.subr.mxu0 0.0
    %242 = vmatpush1.xpose.msra.mxu0 0.0
    %243 = vmatprep.subr.mxu0 0.0
    %244 = vmatpush1.xpose.msra.mxu0 0.0
    %245 = vmatprep.subr.mxu0 0.0
    %246 = vmatpush1.xpose.msra.mxu0 0.0
    %247 = vmatprep.subr.mxu0 0.0
    %248 = vmatpush1.xpose.msra.mxu0 0.0
    %249 = vmatprep.subr.mxu0 0.0
    %250 = vmatpush1.xpose.msra.mxu0 0.0
    %251 = vmatprep.subr.mxu0 0.0
    %252 = vmatpush1.xpose.msra.mxu0 0.0
    %253 = vmatprep.subr.mxu0 0.0
    %254 = vmatpush1.xpose.msra.mxu0 0.0
    %255 = vmatprep.subr.mxu0 0.0
    %256 = vmatpush1.xpose.msra.mxu0 0.0
    %257 = vmatprep.subr.mxu0 0.0
    %258 = vmatpush1.xpose.msra.mxu0 0.0
    %259 = vmatprep.subr.mxu0 0.0
    %260 = vmatpush1.xpose.msra.mxu0 0.0
    %261 = vmatprep.subr.mxu0 0.0
    %262 = vmatpush1.xpose.msra.mxu0 0.0
    %263 = vmatprep.subr.mxu0 0.0
    %264 = vmatpush1.xpose.msra.mxu0 %v233
    %265 = vmatprep.subr.mxu0 0.0
    %266 = vmatpush1.xpose.msra.mxu0 %v231
    %267 = vmatprep.subr.mxu0 0.0
    %268 = vmatpush2.xpose.msra.mxu0 0.0
    %269 = vmatprep.subr.mxu0 0.0
    %270 = vmatpush2.xpose.msra.mxu0 0.0
    %271 = vmatprep.subr.mxu0 0.0
    %272 = vmatpush2.xpose.msra.mxu0 0.0
    %273 = vmatprep.subr.mxu0 0.0
    %274 = vmatpush2.xpose.msra.mxu0 0.0
    %275 = vmatprep.subr.mxu0 0.0
    %276 = vmatpush2.xpose.msra.mxu0 0.0
    %277 = vmatprep.subr.mxu0 0.0
    %278 = vmatpush2.xpose.msra.mxu0 0.0
    %279 = vmatprep.subr.mxu0 0.0
    %280 = vmatpush2.xpose.msra.mxu0 0.0
    %281 = vmatprep.subr.mxu0 0.0
    %282 = vmatpush2.xpose.msra.mxu0 0.0
    %283 = vmatprep.subr.mxu0 0.0
    %284 = vmatpush2.xpose.msra.mxu0 0.0
    %285 = vmatprep.subr.mxu0 0.0
    %286 = vmatpush2.xpose.msra.mxu0 0.0
    %287 = vmatprep.subr.mxu0 0.0
    %288 = vmatpush2.xpose.msra.mxu0 0.0
    %289 = vmatprep.subr.mxu0 0.0
    %290 = vmatpush2.xpose.msra.mxu0 0.0
    %291 = vmatprep.subr.mxu0 0.0
    %292 = vmatpush2.xpose.msra.mxu0 0.0
    %293 = vmatprep.subr.mxu0 0.0
    %294 = vmatpush2.xpose.msra.mxu0 0.0
    %295 = vmatprep.subr.mxu0 0.0
    %296 = vmatpush2.xpose.msra.mxu0 0.0
    %297 = vmatprep.subr.mxu0 0.0
    %298 = vmatpush2.xpose.msra.mxu0 0.0
    %299 = vmatprep.mubr.f32.mxu0 0.0
    %300 = vmatmul.mubr.f32.gmra.mxu0 %v227
    %v301 = vpop.f32.mrf.mxu0
    %v302 = vadd.f32 %v80, %v301
    %v303 = vpop.f32.mrf.mxu0
    %304 = vmatprep.mubr.f32.mxu0 0.0
    %305 = vmatmul.mubr.f32.gmra.mxu0 %v229
    %v306 = vpop.f32.mrf.mxu0
    %v307 = vadd.f32 %v81, %v306
    %v308 = vpop.f32.mrf.mxu0
    %309 = vdwg.mxu0
    %vm310 = vcmask 130048
    %v311 = vsel %vm310, %v302, -inf
    %312 = vmax.xlane.f32.xlu0 %v311
    %v313 = vpop.xlane.xlu0 %312
    %v314 = vsel %vm310, %v307, -inf
    %315 = vmax.xlane.f32.xlu0 %v314
    %v316 = vpop.xlane.xlu0 %315
    %v317 = vsub.f32 %v302, %v313
    %v318 = vsub.f32 %v307, %v316
    %v319 = vmul.f32 %v317, 1.442695
    %v320 = vpow.pop %v319
    %v321 = vmul.f32 %v318, 1.442695
    %v322 = vpow.pop %v321
    %v323 = vsel %vm310, %v320, 0.0
    %324 = vadd.xlane.f32.xlu0 %v323
    %v325 = vpop.xlane.xlu0 %324
    %v326 = vsel %vm310, %v322, 0.0
    %327 = vadd.xlane.f32.xlu0 %v326
    %v328 = vpop.xlane.xlu0 %327
    %v329 = vrcp.pop %v325
    %v330 = vmul.f32 %v320, %v329
    %v331 = vrcp.pop %v328
    %v332 = vmul.f32 %v322, %v331
    %333 = vrot.lane.b32.xlu0 %v211, 64
    %v334 = vpop.permute.xlu0 %333
    %335 = vrot.lane.b32.xlu0 %v216, 64
    %v336 = vpop.permute.xlu0 %335
    %v340 = vsel %vm310, %v330, 0
    %v343 = vsel %vm310, %v332, 0
    %345 = vmatprep.subr.mxu0 0.0
    %346 = vmatpush1.msra.mxu0 0.0
    %347 = vmatprep.subr.mxu0 0.0
    %348 = vmatpush1.msra.mxu0 0.0
    %349 = vmatprep.subr.mxu0 0.0
    %350 = vmatpush1.msra.mxu0 0.0
    %351 = vmatprep.subr.mxu0 0.0
    %352 = vmatpush1.msra.mxu0 0.0
    %353 = vmatprep.subr.mxu0 0.0
    %354 = vmatpush1.msra.mxu0 0.0
    %355 = vmatprep.subr.mxu0 0.0
    %356 = vmatpush1.msra.mxu0 0.0
    %357 = vmatprep.subr.mxu0 0.0
    %358 = vmatpush1.msra.mxu0 0.0
    %359 = vmatprep.subr.mxu0 0.0
    %360 = vmatpush1.msra.mxu0 0.0
    %361 = vmatprep.subr.mxu0 0.0
    %362 = vmatpush1.msra.mxu0 0.0
    %363 = vmatprep.subr.mxu0 0.0
    %364 = vmatpush1.msra.mxu0 0.0
    %365 = vmatprep.subr.mxu0 0.0
    %366 = vmatpush1.msra.mxu0 0.0
    %367 = vmatprep.subr.mxu0 0.0
    %368 = vmatpush1.msra.mxu0 0.0
    %369 = vmatprep.subr.mxu0 0.0
    %370 = vmatpush1.msra.mxu0 0.0
    %371 = vmatprep.subr.mxu0 0.0
    %372 = vmatpush1.msra.mxu0 0.0
    %373 = vmatprep.subr.mxu0 0.0
    %374 = vmatpush1.msra.mxu0 %v336
    %375 = vmatprep.subr.mxu0 0.0
    %376 = vmatpush1.msra.mxu0 %v334
    %377 = vmatprep.subr.mxu0 0.0
    %378 = vmatpush2.msra.mxu0 0.0
    %379 = vmatprep.subr.mxu0 0.0
    %380 = vmatpush2.msra.mxu0 0.0
    %381 = vmatprep.subr.mxu0 0.0
    %382 = vmatpush2.msra.mxu0 0.0
    %383 = vmatprep.subr.mxu0 0.0
    %384 = vmatpush2.msra.mxu0 0.0
    %385 = vmatprep.subr.mxu0 0.0
    %386 = vmatpush2.msra.mxu0 0.0
    %387 = vmatprep.subr.mxu0 0.0
    %388 = vmatpush2.msra.mxu0 0.0
    %389 = vmatprep.subr.mxu0 0.0
    %390 = vmatpush2.msra.mxu0 0.0
    %391 = vmatprep.subr.mxu0 0.0
    %392 = vmatpush2.msra.mxu0 0.0
    %393 = vmatprep.subr.mxu0 0.0
    %394 = vmatpush2.msra.mxu0 0.0
    %395 = vmatprep.subr.mxu0 0.0
    %396 = vmatpush2.msra.mxu0 0.0
    %397 = vmatprep.subr.mxu0 0.0
    %398 = vmatpush2.msra.mxu0 0.0
    %399 = vmatprep.subr.mxu0 0.0
    %400 = vmatpush2.msra.mxu0 0.0
    %401 = vmatprep.subr.mxu0 0.0
    %402 = vmatpush2.msra.mxu0 0.0
    %403 = vmatprep.subr.mxu0 0.0
    %404 = vmatpush2.msra.mxu0 0.0
    %405 = vmatprep.subr.mxu0 0.0
    %406 = vmatpush2.msra.mxu0 0.0
    %407 = vmatprep.subr.mxu0 0.0
    %408 = vmatpush2.msra.mxu0 0.0
    %409 = vmatprep.mubr.f32.mxu0 0.0
    %410 = vmatmul.mubr.f32.gmra.mxu0 %v340
    %v411 = vpop.f32.mrf.mxu0
    %v412 = vadd.f32 0.0, %v411
    %v413 = vpop.f32.mrf.mxu0
    %414 = vmatprep.mubr.f32.mxu0 0.0
    %415 = vmatmul.mubr.f32.gmra.mxu0 %v343
    %v416 = vpop.f32.mrf.mxu0
    %v417 = vadd.f32 0.0, %v416
    %v418 = vpop.f32.mrf.mxu0
    %419 = vdwg.mxu0
    %v421 = vsel %vm226, %v412, 0
    %v424 = vsel %vm226, %v417, 0
    %426 = vmatprep.subr.mxu0 0.0
    %427 = vmatpush1.msra.mxu0 0.0
    %428 = vmatprep.subr.mxu0 0.0
    %429 = vmatpush1.msra.mxu0 0.0
    %430 = vmatprep.subr.mxu0 0.0
    %431 = vmatpush1.msra.mxu0 0.0
    %432 = vmatprep.subr.mxu0 0.0
    %433 = vmatpush1.msra.mxu0 0.0
    %434 = vmatprep.subr.mxu0 0.0
    %435 = vmatpush1.msra.mxu0 0.0
    %436 = vmatprep.subr.mxu0 0.0
    %437 = vmatpush1.msra.mxu0 0.0
    %438 = vmatprep.subr.mxu0 0.0
    %439 = vmatpush1.msra.mxu0 0.0
    %440 = vmatprep.subr.mxu0 0.0
    %441 = vmatpush1.msra.mxu0 0.0
    %442 = vmatprep.subr.mxu0 0.0
    %443 = vmatpush1.msra.mxu0 0.0
    %444 = vmatprep.subr.mxu0 0.0
    %445 = vmatpush1.msra.mxu0 0.0
    %446 = vmatprep.subr.mxu0 0.0
    %447 = vmatpush1.msra.mxu0 0.0
    %448 = vmatprep.subr.mxu0 0.0
    %449 = vmatpush1.msra.mxu0 0.0
    %450 = vmatprep.subr.mxu0 0.0
    %451 = vmatpush1.msra.mxu0 0.0
    %452 = vmatprep.subr.mxu0 0.0
    %453 = vmatpush1.msra.mxu0 0.0
    %454 = vmatprep.subr.mxu0 0.0
    %455 = vmatpush1.msra.mxu0 0.0
    %456 = vmatprep.subr.mxu0 0.0
    %457 = vmatpush1.msra.mxu0 %v83
    %458 = vmatprep.subr.mxu0 0.0
    %459 = vmatpush2.msra.mxu0 0.0
    %460 = vmatprep.subr.mxu0 0.0
    %461 = vmatpush2.msra.mxu0 0.0
    %462 = vmatprep.subr.mxu0 0.0
    %463 = vmatpush2.msra.mxu0 0.0
    %464 = vmatprep.subr.mxu0 0.0
    %465 = vmatpush2.msra.mxu0 0.0
    %466 = vmatprep.subr.mxu0 0.0
    %467 = vmatpush2.msra.mxu0 0.0
    %468 = vmatprep.subr.mxu0 0.0
    %469 = vmatpush2.msra.mxu0 0.0
    %470 = vmatprep.subr.mxu0 0.0
    %471 = vmatpush2.msra.mxu0 0.0
    %472 = vmatprep.subr.mxu0 0.0
    %473 = vmatpush2.msra.mxu0 0.0
    %474 = vmatprep.subr.mxu0 0.0
    %475 = vmatpush2.msra.mxu0 0.0
    %476 = vmatprep.subr.mxu0 0.0
    %477 = vmatpush2.msra.mxu0 0.0
    %478 = vmatprep.subr.mxu0 0.0
    %479 = vmatpush2.msra.mxu0 0.0
    %480 = vmatprep.subr.mxu0 0.0
    %481 = vmatpush2.msra.mxu0 0.0
    %482 = vmatprep.subr.mxu0 0.0
    %483 = vmatpush2.msra.mxu0 0.0
    %484 = vmatprep.subr.mxu0 0.0
    %485 = vmatpush2.msra.mxu0 0.0
    %486 = vmatprep.subr.mxu0 0.0
    %487 = vmatpush2.msra.mxu0 0.0
    %488 = vmatprep.subr.mxu0 0.0
    %489 = vmatpush2.msra.mxu0 0.0
    %490 = vmatprep.mubr.f32.mxu0 0.0
    %491 = vmatmul.mubr.f32.gmra.mxu0 %v421
    %v492 = vpop.f32.mrf.mxu0
    %v493 = vadd.f32 0.0, %v492
    %v494 = vpop.f32.mrf.mxu0
    %495 = vmatprep.mubr.f32.mxu0 0.0
    %496 = vmatmul.mubr.f32.gmra.mxu0 %v424
    %v497 = vpop.f32.mrf.mxu0
    %v498 = vadd.f32 0.0, %v497
    %v499 = vpop.f32.mrf.mxu0
    %500 = vdwg.mxu0
    %v502 = vlaneseq
    %v503 = vshrl.u32 %v502, 7
    %v504 = vsub.s32 0, %v503
    %v505 = vrot.slane %v219, %v504
    %v507 = vadd.f32 %v505, %v493
    %v508 = vadd.f32 %v505, %v498
    %509 = vrot.lane.b32.xlu0 %v211, 120
    %v510 = vpop.permute.xlu0 %509
    %511 = vrot.lane.b32.xlu0 %v216, 120
    %v512 = vpop.permute.xlu0 %511
    %513 = vrot.lane.b32.xlu0 %v211, 88
    %v514 = vpop.permute.xlu0 %513
    %515 = vrot.lane.b32.xlu0 %v216, 88
    %v516 = vpop.permute.xlu0 %515
    %v517 = vsel %vm226, %v510, 0
    %v519 = vsel %vm226, %v512, 0
    %v521 = vsel %vm226, %v514, 0
    %v523 = vsel %vm226, %v516, 0
    %525 = vmatprep.subr.mxu0 0.0
    %526 = vmatpush1.xpose.msra.mxu0 0.0
    %527 = vmatprep.subr.mxu0 0.0
    %528 = vmatpush1.xpose.msra.mxu0 0.0
    %529 = vmatprep.subr.mxu0 0.0
    %530 = vmatpush1.xpose.msra.mxu0 0.0
    %531 = vmatprep.subr.mxu0 0.0
    %532 = vmatpush1.xpose.msra.mxu0 0.0
    %533 = vmatprep.subr.mxu0 0.0
    %534 = vmatpush1.xpose.msra.mxu0 0.0
    %535 = vmatprep.subr.mxu0 0.0
    %536 = vmatpush1.xpose.msra.mxu0 0.0
    %537 = vmatprep.subr.mxu0 0.0
    %538 = vmatpush1.xpose.msra.mxu0 0.0
    %539 = vmatprep.subr.mxu0 0.0
    %540 = vmatpush1.xpose.msra.mxu0 0.0
    %541 = vmatprep.subr.mxu0 0.0
    %542 = vmatpush1.xpose.msra.mxu0 0.0
    %543 = vmatprep.subr.mxu0 0.0
    %544 = vmatpush1.xpose.msra.mxu0 0.0
    %545 = vmatprep.subr.mxu0 0.0
    %546 = vmatpush1.xpose.msra.mxu0 0.0
    %547 = vmatprep.subr.mxu0 0.0
    %548 = vmatpush1.xpose.msra.mxu0 0.0
    %549 = vmatprep.subr.mxu0 0.0
    %550 = vmatpush1.xpose.msra.mxu0 0.0
    %551 = vmatprep.subr.mxu0 0.0
    %552 = vmatpush1.xpose.msra.mxu0 0.0
    %553 = vmatprep.subr.mxu0 0.0
    %554 = vmatpush1.xpose.msra.mxu0 %v523
    %555 = vmatprep.subr.mxu0 0.0
    %556 = vmatpush1.xpose.msra.mxu0 %v521
    %557 = vmatprep.subr.mxu0 0.0
    %558 = vmatpush2.xpose.msra.mxu0 0.0
    %559 = vmatprep.subr.mxu0 0.0
    %560 = vmatpush2.xpose.msra.mxu0 0.0
    %561 = vmatprep.subr.mxu0 0.0
    %562 = vmatpush2.xpose.msra.mxu0 0.0
    %563 = vmatprep.subr.mxu0 0.0
    %564 = vmatpush2.xpose.msra.mxu0 0.0
    %565 = vmatprep.subr.mxu0 0.0
    %566 = vmatpush2.xpose.msra.mxu0 0.0
    %567 = vmatprep.subr.mxu0 0.0
    %568 = vmatpush2.xpose.msra.mxu0 0.0
    %569 = vmatprep.subr.mxu0 0.0
    %570 = vmatpush2.xpose.msra.mxu0 0.0
    %571 = vmatprep.subr.mxu0 0.0
    %572 = vmatpush2.xpose.msra.mxu0 0.0
    %573 = vmatprep.subr.mxu0 0.0
    %574 = vmatpush2.xpose.msra.mxu0 0.0
    %575 = vmatprep.subr.mxu0 0.0
    %576 = vmatpush2.xpose.msra.mxu0 0.0
    %577 = vmatprep.subr.mxu0 0.0
    %578 = vmatpush2.xpose.msra.mxu0 0.0
    %579 = vmatprep.subr.mxu0 0.0
    %580 = vmatpush2.xpose.msra.mxu0 0.0
    %581 = vmatprep.subr.mxu0 0.0
    %582 = vmatpush2.xpose.msra.mxu0 0.0
    %583 = vmatprep.subr.mxu0 0.0
    %584 = vmatpush2.xpose.msra.mxu0 0.0
    %585 = vmatprep.subr.mxu0 0.0
    %586 = vmatpush2.xpose.msra.mxu0 0.0
    %587 = vmatprep.subr.mxu0 0.0
    %588 = vmatpush2.xpose.msra.mxu0 0.0
    %589 = vmatprep.mubr.f32.mxu0 0.0
    %590 = vmatmul.mubr.f32.gmra.mxu0 %v517
    %v591 = vpop.f32.mrf.mxu0
    %v592 = vadd.f32 %v80, %v591
    %v593 = vpop.f32.mrf.mxu0
    %594 = vmatprep.mubr.f32.mxu0 0.0
    %595 = vmatmul.mubr.f32.gmra.mxu0 %v519
    %v596 = vpop.f32.mrf.mxu0
    %v597 = vadd.f32 %v81, %v596
    %v598 = vpop.f32.mrf.mxu0
    %599 = vdwg.mxu0
    %v600 = vsel %vm310, %v592, -inf
    %601 = vmax.xlane.f32.xlu0 %v600
    %v602 = vpop.xlane.xlu0 %601
    %v603 = vsel %vm310, %v597, -inf
    %604 = vmax.xlane.f32.xlu0 %v603
    %v605 = vpop.xlane.xlu0 %604
    %v606 = vsub.f32 %v592, %v602
    %v607 = vsub.f32 %v597, %v605
    %v608 = vmul.f32 %v606, 1.442695
    %v609 = vpow.pop %v608
    %v610 = vmul.f32 %v607, 1.442695
    %v611 = vpow.pop %v610
    %v612 = vsel %vm310, %v609, 0.0
    %613 = vadd.xlane.f32.xlu0 %v612
    %v614 = vpop.xlane.xlu0 %613
    %v615 = vsel %vm310, %v611, 0.0
    %616 = vadd.xlane.f32.xlu0 %v615
    %v617 = vpop.xlane.xlu0 %616
    %v618 = vrcp.pop %v614
    %v619 = vmul.f32 %v609, %v618
    %v620 = vrcp.pop %v617
    %v621 = vmul.f32 %v611, %v620
    %622 = vrot.lane.b32.xlu0 %v211, 56
    %v623 = vpop.permute.xlu0 %622
    %624 = vrot.lane.b32.xlu0 %v216, 56
    %v625 = vpop.permute.xlu0 %624
    %v629 = vsel %vm310, %v619, 0
    %v632 = vsel %vm310, %v621, 0
    %634 = vmatprep.subr.mxu0 0.0
    %635 = vmatpush1.msra.mxu0 0.0
    %636 = vmatprep.subr.mxu0 0.0
    %637 = vmatpush1.msra.mxu0 0.0
    %638 = vmatprep.subr.mxu0 0.0
    %639 = vmatpush1.msra.mxu0 0.0
    %640 = vmatprep.subr.mxu0 0.0
    %641 = vmatpush1.msra.mxu0 0.0
    %642 = vmatprep.subr.mxu0 0.0
    %643 = vmatpush1.msra.mxu0 0.0
    %644 = vmatprep.subr.mxu0 0.0
    %645 = vmatpush1.msra.mxu0 0.0
    %646 = vmatprep.subr.mxu0 0.0
    %647 = vmatpush1.msra.mxu0 0.0
    %648 = vmatprep.subr.mxu0 0.0
    %649 = vmatpush1.msra.mxu0 0.0
    %650 = vmatprep.subr.mxu0 0.0
    %651 = vmatpush1.msra.mxu0 0.0
    %652 = vmatprep.subr.mxu0 0.0
    %653 = vmatpush1.msra.mxu0 0.0
    %654 = vmatprep.subr.mxu0 0.0
    %655 = vmatpush1.msra.mxu0 0.0
    %656 = vmatprep.subr.mxu0 0.0
    %657 = vmatpush1.msra.mxu0 0.0
    %658 = vmatprep.subr.mxu0 0.0
    %659 = vmatpush1.msra.mxu0 0.0
    %660 = vmatprep.subr.mxu0 0.0
    %661 = vmatpush1.msra.mxu0 0.0
    %662 = vmatprep.subr.mxu0 0.0
    %663 = vmatpush1.msra.mxu0 %v625
    %664 = vmatprep.subr.mxu0 0.0
    %665 = vmatpush1.msra.mxu0 %v623
    %666 = vmatprep.subr.mxu0 0.0
    %667 = vmatpush2.msra.mxu0 0.0
    %668 = vmatprep.subr.mxu0 0.0
    %669 = vmatpush2.msra.mxu0 0.0
    %670 = vmatprep.subr.mxu0 0.0
    %671 = vmatpush2.msra.mxu0 0.0
    %672 = vmatprep.subr.mxu0 0.0
    %673 = vmatpush2.msra.mxu0 0.0
    %674 = vmatprep.subr.mxu0 0.0
    %675 = vmatpush2.msra.mxu0 0.0
    %676 = vmatprep.subr.mxu0 0.0
    %677 = vmatpush2.msra.mxu0 0.0
    %678 = vmatprep.subr.mxu0 0.0
    %679 = vmatpush2.msra.mxu0 0.0
    %680 = vmatprep.subr.mxu0 0.0
    %681 = vmatpush2.msra.mxu0 0.0
    %682 = vmatprep.subr.mxu0 0.0
    %683 = vmatpush2.msra.mxu0 0.0
    %684 = vmatprep.subr.mxu0 0.0
    %685 = vmatpush2.msra.mxu0 0.0
    %686 = vmatprep.subr.mxu0 0.0
    %687 = vmatpush2.msra.mxu0 0.0
    %688 = vmatprep.subr.mxu0 0.0
    %689 = vmatpush2.msra.mxu0 0.0
    %690 = vmatprep.subr.mxu0 0.0
    %691 = vmatpush2.msra.mxu0 0.0
    %692 = vmatprep.subr.mxu0 0.0
    %693 = vmatpush2.msra.mxu0 0.0
    %694 = vmatprep.subr.mxu0 0.0
    %695 = vmatpush2.msra.mxu0 0.0
    %696 = vmatprep.subr.mxu0 0.0
    %697 = vmatpush2.msra.mxu0 0.0
    %698 = vmatprep.mubr.f32.mxu0 0.0
    %699 = vmatmul.mubr.f32.gmra.mxu0 %v629
    %v700 = vpop.f32.mrf.mxu0
    %v701 = vadd.f32 0.0, %v700
    %v702 = vpop.f32.mrf.mxu0
    %703 = vmatprep.mubr.f32.mxu0 0.0
    %704 = vmatmul.mubr.f32.gmra.mxu0 %v632
    %v705 = vpop.f32.mrf.mxu0
    %v706 = vadd.f32 0.0, %v705
    %v707 = vpop.f32.mrf.mxu0
    %708 = vdwg.mxu0
    %v710 = vsel %vm226, %v701, 0
    %v713 = vsel %vm226, %v706, 0
    %715 = vmatprep.subr.mxu0 0.0
    %716 = vmatpush1.msra.mxu0 0.0
    %717 = vmatprep.subr.mxu0 0.0
    %718 = vmatpush1.msra.mxu0 0.0
    %719 = vmatprep.subr.mxu0 0.0
    %720 = vmatpush1.msra.mxu0 0.0
    %721 = vmatprep.subr.mxu0 0.0
    %722 = vmatpush1.msra.mxu0 0.0
    %723 = vmatprep.subr.mxu0 0.0
    %724 = vmatpush1.msra.mxu0 0.0
    %725 = vmatprep.subr.mxu0 0.0
    %726 = vmatpush1.msra.mxu0 0.0
    %727 = vmatprep.subr.mxu0 0.0
    %728 = vmatpush1.msra.mxu0 0.0
    %729 = vmatprep.subr.mxu0 0.0
    %730 = vmatpush1.msra.mxu0 0.0
    %731 = vmatprep.subr.mxu0 0.0
    %732 = vmatpush1.msra.mxu0 0.0
    %733 = vmatprep.subr.mxu0 0.0
    %734 = vmatpush1.msra.mxu0 0.0
    %735 = vmatprep.subr.mxu0 0.0
    %736 = vmatpush1.msra.mxu0 0.0
    %737 = vmatprep.subr.mxu0 0.0
    %738 = vmatpush1.msra.mxu0 0.0
    %739 = vmatprep.subr.mxu0 0.0
    %740 = vmatpush1.msra.mxu0 0.0
    %741 = vmatprep.subr.mxu0 0.0
    %742 = vmatpush1.msra.mxu0 0.0
    %743 = vmatprep.subr.mxu0 0.0
    %744 = vmatpush1.msra.mxu0 0.0
    %745 = vmatprep.subr.mxu0 0.0
    %746 = vmatpush1.msra.mxu0 %v84
    %747 = vmatprep.subr.mxu0 0.0
    %748 = vmatpush2.msra.mxu0 0.0
    %749 = vmatprep.subr.mxu0 0.0
    %750 = vmatpush2.msra.mxu0 0.0
    %751 = vmatprep.subr.mxu0 0.0
    %752 = vmatpush2.msra.mxu0 0.0
    %753 = vmatprep.subr.mxu0 0.0
    %754 = vmatpush2.msra.mxu0 0.0
    %755 = vmatprep.subr.mxu0 0.0
    %756 = vmatpush2.msra.mxu0 0.0
    %757 = vmatprep.subr.mxu0 0.0
    %758 = vmatpush2.msra.mxu0 0.0
    %759 = vmatprep.subr.mxu0 0.0
    %760 = vmatpush2.msra.mxu0 0.0
    %761 = vmatprep.subr.mxu0 0.0
    %762 = vmatpush2.msra.mxu0 0.0
    %763 = vmatprep.subr.mxu0 0.0
    %764 = vmatpush2.msra.mxu0 0.0
    %765 = vmatprep.subr.mxu0 0.0
    %766 = vmatpush2.msra.mxu0 0.0
    %767 = vmatprep.subr.mxu0 0.0
    %768 = vmatpush2.msra.mxu0 0.0
    %769 = vmatprep.subr.mxu0 0.0
    %770 = vmatpush2.msra.mxu0 0.0
    %771 = vmatprep.subr.mxu0 0.0
    %772 = vmatpush2.msra.mxu0 0.0
    %773 = vmatprep.subr.mxu0 0.0
    %774 = vmatpush2.msra.mxu0 0.0
    %775 = vmatprep.subr.mxu0 0.0
    %776 = vmatpush2.msra.mxu0 0.0
    %777 = vmatprep.subr.mxu0 0.0
    %778 = vmatpush2.msra.mxu0 0.0
    %779 = vmatprep.mubr.f32.mxu0 0.0
    %780 = vmatmul.mubr.f32.gmra.mxu0 %v710
    %v781 = vpop.f32.mrf.mxu0
    %v782 = vadd.f32 0.0, %v781
    %v783 = vpop.f32.mrf.mxu0
    %784 = vmatprep.mubr.f32.mxu0 0.0
    %785 = vmatmul.mubr.f32.gmra.mxu0 %v713
    %v786 = vpop.f32.mrf.mxu0
    %v787 = vadd.f32 0.0, %v786
    %v788 = vpop.f32.mrf.mxu0
    %789 = vdwg.mxu0
    %v790 = vadd.f32 %v507, %v782
    %v791 = vadd.f32 %v508, %v787
    %792 = vrot.lane.b32.xlu0 %v211, 112
    %v793 = vpop.permute.xlu0 %792
    %794 = vrot.lane.b32.xlu0 %v216, 112
    %v795 = vpop.permute.xlu0 %794
    %796 = vrot.lane.b32.xlu0 %v211, 80
    %v797 = vpop.permute.xlu0 %796
    %798 = vrot.lane.b32.xlu0 %v216, 80
    %v799 = vpop.permute.xlu0 %798
    %v800 = vsel %vm226, %v793, 0
    %v802 = vsel %vm226, %v795, 0
    %v804 = vsel %vm226, %v797, 0
    %v806 = vsel %vm226, %v799, 0
    %808 = vmatprep.subr.mxu0 0.0
    %809 = vmatpush1.xpose.msra.mxu0 0.0
    %810 = vmatprep.subr.mxu0 0.0
    %811 = vmatpush1.xpose.msra.mxu0 0.0
    %812 = vmatprep.subr.mxu0 0.0
    %813 = vmatpush1.xpose.msra.mxu0 0.0
    %814 = vmatprep.subr.mxu0 0.0
    %815 = vmatpush1.xpose.msra.mxu0 0.0
    %816 = vmatprep.subr.mxu0 0.0
    %817 = vmatpush1.xpose.msra.mxu0 0.0
    %818 = vmatprep.subr.mxu0 0.0
    %819 = vmatpush1.xpose.msra.mxu0 0.0
    %820 = vmatprep.subr.mxu0 0.0
    %821 = vmatpush1.xpose.msra.mxu0 0.0
    %822 = vmatprep.subr.mxu0 0.0
    %823 = vmatpush1.xpose.msra.mxu0 0.0
    %824 = vmatprep.subr.mxu0 0.0
    %825 = vmatpush1.xpose.msra.mxu0 0.0
    %826 = vmatprep.subr.mxu0 0.0
    %827 = vmatpush1.xpose.msra.mxu0 0.0
    %828 = vmatprep.subr.mxu0 0.0
    %829 = vmatpush1.xpose.msra.mxu0 0.0
    %830 = vmatprep.subr.mxu0 0.0
    %831 = vmatpush1.xpose.msra.mxu0 0.0
    %832 = vmatprep.subr.mxu0 0.0
    %833 = vmatpush1.xpose.msra.mxu0 0.0
    %834 = vmatprep.subr.mxu0 0.0
    %835 = vmatpush1.xpose.msra.mxu0 0.0
    %836 = vmatprep.subr.mxu0 0.0
    %837 = vmatpush1.xpose.msra.mxu0 %v806
    %838 = vmatprep.subr.mxu0 0.0
    %839 = vmatpush1.xpose.msra.mxu0 %v804
    %840 = vmatprep.subr.mxu0 0.0
    %841 = vmatpush2.xpose.msra.mxu0 0.0
    %842 = vmatprep.subr.mxu0 0.0
    %843 = vmatpush2.xpose.msra.mxu0 0.0
    %844 = vmatprep.subr.mxu0 0.0
    %845 = vmatpush2.xpose.msra.mxu0 0.0
    %846 = vmatprep.subr.mxu0 0.0
    %847 = vmatpush2.xpose.msra.mxu0 0.0
    %848 = vmatprep.subr.mxu0 0.0
    %849 = vmatpush2.xpose.msra.mxu0 0.0
    %850 = vmatprep.subr.mxu0 0.0
    %851 = vmatpush2.xpose.msra.mxu0 0.0
    %852 = vmatprep.subr.mxu0 0.0
    %853 = vmatpush2.xpose.msra.mxu0 0.0
    %854 = vmatprep.subr.mxu0 0.0
    %855 = vmatpush2.xpose.msra.mxu0 0.0
    %856 = vmatprep.subr.mxu0 0.0
    %857 = vmatpush2.xpose.msra.mxu0 0.0
    %858 = vmatprep.subr.mxu0 0.0
    %859 = vmatpush2.xpose.msra.mxu0 0.0
    %860 = vmatprep.subr.mxu0 0.0
    %861 = vmatpush2.xpose.msra.mxu0 0.0
    %862 = vmatprep.subr.mxu0 0.0
    %863 = vmatpush2.xpose.msra.mxu0 0.0
    %864 = vmatprep.subr.mxu0 0.0
    %865 = vmatpush2.xpose.msra.mxu0 0.0
    %866 = vmatprep.subr.mxu0 0.0
    %867 = vmatpush2.xpose.msra.mxu0 0.0
    %868 = vmatprep.subr.mxu0 0.0
    %869 = vmatpush2.xpose.msra.mxu0 0.0
    %870 = vmatprep.subr.mxu0 0.0
    %871 = vmatpush2.xpose.msra.mxu0 0.0
    %872 = vmatprep.mubr.f32.mxu0 0.0
    %873 = vmatmul.mubr.f32.gmra.mxu0 %v800
    %v874 = vpop.f32.mrf.mxu0
    %v875 = vadd.f32 %v80, %v874
    %v876 = vpop.f32.mrf.mxu0
    %877 = vmatprep.mubr.f32.mxu0 0.0
    %878 = vmatmul.mubr.f32.gmra.mxu0 %v802
    %v879 = vpop.f32.mrf.mxu0
    %v880 = vadd.f32 %v81, %v879
    %v881 = vpop.f32.mrf.mxu0
    %882 = vdwg.mxu0
    %v883 = vsel %vm310, %v875, -inf
    %884 = vmax.xlane.f32.xlu0 %v883
    %v885 = vpop.xlane.xlu0 %884
    %v886 = vsel %vm310, %v880, -inf
    %887 = vmax.xlane.f32.xlu0 %v886
    %v888 = vpop.xlane.xlu0 %887
    %v889 = vsub.f32 %v875, %v885
    %v890 = vsub.f32 %v880, %v888
    %v891 = vmul.f32 %v889, 1.442695
    %v892 = vpow.pop %v891
    %v893 = vmul.f32 %v890, 1.442695
    %v894 = vpow.pop %v893
    %v895 = vsel %vm310, %v892, 0.0
    %896 = vadd.xlane.f32.xlu0 %v895
    %v897 = vpop.xlane.xlu0 %896
    %v898 = vsel %vm310, %v894, 0.0
    %899 = vadd.xlane.f32.xlu0 %v898
    %v900 = vpop.xlane.xlu0 %899
    %v901 = vrcp.pop %v897
    %v902 = vmul.f32 %v892, %v901
    %v903 = vrcp.pop %v900
    %v904 = vmul.f32 %v894, %v903
    %905 = vrot.lane.b32.xlu0 %v211, 48
    %v906 = vpop.permute.xlu0 %905
    %907 = vrot.lane.b32.xlu0 %v216, 48
    %v908 = vpop.permute.xlu0 %907
    %v912 = vsel %vm310, %v902, 0
    %v915 = vsel %vm310, %v904, 0
    %917 = vmatprep.subr.mxu0 0.0
    %918 = vmatpush1.msra.mxu0 0.0
    %919 = vmatprep.subr.mxu0 0.0
    %920 = vmatpush1.msra.mxu0 0.0
    %921 = vmatprep.subr.mxu0 0.0
    %922 = vmatpush1.msra.mxu0 0.0
    %923 = vmatprep.subr.mxu0 0.0
    %924 = vmatpush1.msra.mxu0 0.0
    %925 = vmatprep.subr.mxu0 0.0
    %926 = vmatpush1.msra.mxu0 0.0
    %927 = vmatprep.subr.mxu0 0.0
    %928 = vmatpush1.msra.mxu0 0.0
    %929 = vmatprep.subr.mxu0 0.0
    %930 = vmatpush1.msra.mxu0 0.0
    %931 = vmatprep.subr.mxu0 0.0
    %932 = vmatpush1.msra.mxu0 0.0
    %933 = vmatprep.subr.mxu0 0.0
    %934 = vmatpush1.msra.mxu0 0.0
    %935 = vmatprep.subr.mxu0 0.0
    %936 = vmatpush1.msra.mxu0 0.0
    %937 = vmatprep.subr.mxu0 0.0
    %938 = vmatpush1.msra.mxu0 0.0
    %939 = vmatprep.subr.mxu0 0.0
    %940 = vmatpush1.msra.mxu0 0.0
    %941 = vmatprep.subr.mxu0 0.0
    %942 = vmatpush1.msra.mxu0 0.0
    %943 = vmatprep.subr.mxu0 0.0
    %944 = vmatpush1.msra.mxu0 0.0
    %945 = vmatprep.subr.mxu0 0.0
    %946 = vmatpush1.msra.mxu0 %v908
    %947 = vmatprep.subr.mxu0 0.0
    %948 = vmatpush1.msra.mxu0 %v906
    %949 = vmatprep.subr.mxu0 0.0
    %950 = vmatpush2.msra.mxu0 0.0
    %951 = vmatprep.subr.mxu0 0.0
    %952 = vmatpush2.msra.mxu0 0.0
    %953 = vmatprep.subr.mxu0 0.0
    %954 = vmatpush2.msra.mxu0 0.0
    %955 = vmatprep.subr.mxu0 0.0
    %956 = vmatpush2.msra.mxu0 0.0
    %957 = vmatprep.subr.mxu0 0.0
    %958 = vmatpush2.msra.mxu0 0.0
    %959 = vmatprep.subr.mxu0 0.0
    %960 = vmatpush2.msra.mxu0 0.0
    %961 = vmatprep.subr.mxu0 0.0
    %962 = vmatpush2.msra.mxu0 0.0
    %963 = vmatprep.subr.mxu0 0.0
    %964 = vmatpush2.msra.mxu0 0.0
    %965 = vmatprep.subr.mxu0 0.0
    %966 = vmatpush2.msra.mxu0 0.0
    %967 = vmatprep.subr.mxu0 0.0
    %968 = vmatpush2.msra.mxu0 0.0
    %969 = vmatprep.subr.mxu0 0.0
    %970 = vmatpush2.msra.mxu0 0.0
    %971 = vmatprep.subr.mxu0 0.0
    %972 = vmatpush2.msra.mxu0 0.0
    %973 = vmatprep.subr.mxu0 0.0
    %974 = vmatpush2.msra.mxu0 0.0
    %975 = vmatprep.subr.mxu0 0.0
    %976 = vmatpush2.msra.mxu0 0.0
    %977 = vmatprep.subr.mxu0 0.0
    %978 = vmatpush2.msra.mxu0 0.0
    %979 = vmatprep.subr.mxu0 0.0
    %980 = vmatpush2.msra.mxu0 0.0
    %981 = vmatprep.mubr.f32.mxu0 0.0
    %982 = vmatmul.mubr.f32.gmra.mxu0 %v912
    %v983 = vpop.f32.mrf.mxu0
    %v984 = vadd.f32 0.0, %v983
    %v985 = vpop.f32.mrf.mxu0
    %986 = vmatprep.mubr.f32.mxu0 0.0
    %987 = vmatmul.mubr.f32.gmra.mxu0 %v915
    %v988 = vpop.f32.mrf.mxu0
    %v989 = vadd.f32 0.0, %v988
    %v990 = vpop.f32.mrf.mxu0
    %991 = vdwg.mxu0
    %v993 = vsel %vm226, %v984, 0
    %v996 = vsel %vm226, %v989, 0
    %998 = vmatprep.subr.mxu0 0.0
    %999 = vmatpush1.msra.mxu0 0.0
    %1000 = vmatprep.subr.mxu0 0.0
    %1001 = vmatpush1.msra.mxu0 0.0
    %1002 = vmatprep.subr.mxu0 0.0
    %1003 = vmatpush1.msra.mxu0 0.0
    %1004 = vmatprep.subr.mxu0 0.0
    %1005 = vmatpush1.msra.mxu0 0.0
    %1006 = vmatprep.subr.mxu0 0.0
    %1007 = vmatpush1.msra.mxu0 0.0
    %1008 = vmatprep.subr.mxu0 0.0
    %1009 = vmatpush1.msra.mxu0 0.0
    %1010 = vmatprep.subr.mxu0 0.0
    %1011 = vmatpush1.msra.mxu0 0.0
    %1012 = vmatprep.subr.mxu0 0.0
    %1013 = vmatpush1.msra.mxu0 0.0
    %1014 = vmatprep.subr.mxu0 0.0
    %1015 = vmatpush1.msra.mxu0 0.0
    %1016 = vmatprep.subr.mxu0 0.0
    %1017 = vmatpush1.msra.mxu0 0.0
    %1018 = vmatprep.subr.mxu0 0.0
    %1019 = vmatpush1.msra.mxu0 0.0
    %1020 = vmatprep.subr.mxu0 0.0
    %1021 = vmatpush1.msra.mxu0 0.0
    %1022 = vmatprep.subr.mxu0 0.0
    %1023 = vmatpush1.msra.mxu0 0.0
    %1024 = vmatprep.subr.mxu0 0.0
    %1025 = vmatpush1.msra.mxu0 0.0
    %1026 = vmatprep.subr.mxu0 0.0
    %1027 = vmatpush1.msra.mxu0 0.0
    %1028 = vmatprep.subr.mxu0 0.0
    %1029 = vmatpush1.msra.mxu0 %v85
    %1030 = vmatprep.subr.mxu0 0.0
    %1031 = vmatpush2.msra.mxu0 0.0
    %1032 = vmatprep.subr.mxu0 0.0
    %1033 = vmatpush2.msra.mxu0 0.0
    %1034 = vmatprep.subr.mxu0 0.0
    %1035 = vmatpush2.msra.mxu0 0.0
    %1036 = vmatprep.subr.mxu0 0.0
    %1037 = vmatpush2.msra.mxu0 0.0
    %1038 = vmatprep.subr.mxu0 0.0
    %1039 = vmatpush2.msra.mxu0 0.0
    %1040 = vmatprep.subr.mxu0 0.0
    %1041 = vmatpush2.msra.mxu0 0.0
    %1042 = vmatprep.subr.mxu0 0.0
    %1043 = vmatpush2.msra.mxu0 0.0
    %1044 = vmatprep.subr.mxu0 0.0
    %1045 = vmatpush2.msra.mxu0 0.0
    %1046 = vmatprep.subr.mxu0 0.0
    %1047 = vmatpush2.msra.mxu0 0.0
    %1048 = vmatprep.subr.mxu0 0.0
    %1049 = vmatpush2.msra.mxu0 0.0
    %1050 = vmatprep.subr.mxu0 0.0
    %1051 = vmatpush2.msra.mxu0 0.0
    %1052 = vmatprep.subr.mxu0 0.0
    %1053 = vmatpush2.msra.mxu0 0.0
    %1054 = vmatprep.subr.mxu0 0.0
    %1055 = vmatpush2.msra.mxu0 0.0
    %1056 = vmatprep.subr.mxu0 0.0
    %1057 = vmatpush2.msra.mxu0 0.0
    %1058 = vmatprep.subr.mxu0 0.0
    %1059 = vmatpush2.msra.mxu0 0.0
    %1060 = vmatprep.subr.mxu0 0.0
    %1061 = vmatpush2.msra.mxu0 0.0
    %1062 = vmatprep.mubr.f32.mxu0 0.0
    %1063 = vmatmul.mubr.f32.gmra.mxu0 %v993
    %v1064 = vpop.f32.mrf.mxu0
    %v1065 = vadd.f32 0.0, %v1064
    %v1066 = vpop.f32.mrf.mxu0
    %1067 = vmatprep.mubr.f32.mxu0 0.0
    %1068 = vmatmul.mubr.f32.gmra.mxu0 %v996
    %v1069 = vpop.f32.mrf.mxu0
    %v1070 = vadd.f32 0.0, %v1069
    %v1071 = vpop.f32.mrf.mxu0
    %1072 = vdwg.mxu0
    %v1073 = vadd.f32 %v790, %v1065
    %v1074 = vadd.f32 %v791, %v1070
    %1075 = vrot.lane.b32.xlu0 %v211, 104
    %v1076 = vpop.permute.xlu0 %1075
    %1077 = vrot.lane.b32.xlu0 %v216, 104
    %v1078 = vpop.permute.xlu0 %1077
    %1079 = vrot.lane.b32.xlu0 %v211, 72
    %v1080 = vpop.permute.xlu0 %1079
    %1081 = vrot.lane.b32.xlu0 %v216, 72
    %v1082 = vpop.permute.xlu0 %1081
    %v1083 = vsel %vm226, %v1076, 0
    %v1085 = vsel %vm226, %v1078, 0
    %v1087 = vsel %vm226, %v1080, 0
    %v1089 = vsel %vm226, %v1082, 0
    %1091 = vmatprep.subr.mxu0 0.0
    %1092 = vmatpush1.xpose.msra.mxu0 0.0
    %1093 = vmatprep.subr.mxu0 0.0
    %1094 = vmatpush1.xpose.msra.mxu0 0.0
    %1095 = vmatprep.subr.mxu0 0.0
    %1096 = vmatpush1.xpose.msra.mxu0 0.0
    %1097 = vmatprep.subr.mxu0 0.0
    %1098 = vmatpush1.xpose.msra.mxu0 0.0
    %1099 = vmatprep.subr.mxu0 0.0
    %1100 = vmatpush1.xpose.msra.mxu0 0.0
    %1101 = vmatprep.subr.mxu0 0.0
    %1102 = vmatpush1.xpose.msra.mxu0 0.0
    %1103 = vmatprep.subr.mxu0 0.0
    %1104 = vmatpush1.xpose.msra.mxu0 0.0
    %1105 = vmatprep.subr.mxu0 0.0
    %1106 = vmatpush1.xpose.msra.mxu0 0.0
    %1107 = vmatprep.subr.mxu0 0.0
    %1108 = vmatpush1.xpose.msra.mxu0 0.0
    %1109 = vmatprep.subr.mxu0 0.0
    %1110 = vmatpush1.xpose.msra.mxu0 0.0
    %1111 = vmatprep.subr.mxu0 0.0
    %1112 = vmatpush1.xpose.msra.mxu0 0.0
    %1113 = vmatprep.subr.mxu0 0.0
    %1114 = vmatpush1.xpose.msra.mxu0 0.0
    %1115 = vmatprep.subr.mxu0 0.0
    %1116 = vmatpush1.xpose.msra.mxu0 0.0
    %1117 = vmatprep.subr.mxu0 0.0
    %1118 = vmatpush1.xpose.msra.mxu0 0.0
    %1119 = vmatprep.subr.mxu0 0.0
    %1120 = vmatpush1.xpose.msra.mxu0 %v1089
    %1121 = vmatprep.subr.mxu0 0.0
    %1122 = vmatpush1.xpose.msra.mxu0 %v1087
    %1123 = vmatprep.subr.mxu0 0.0
    %1124 = vmatpush2.xpose.msra.mxu0 0.0
    %1125 = vmatprep.subr.mxu0 0.0
    %1126 = vmatpush2.xpose.msra.mxu0 0.0
    %1127 = vmatprep.subr.mxu0 0.0
    %1128 = vmatpush2.xpose.msra.mxu0 0.0
    %1129 = vmatprep.subr.mxu0 0.0
    %1130 = vmatpush2.xpose.msra.mxu0 0.0
    %1131 = vmatprep.subr.mxu0 0.0
    %1132 = vmatpush2.xpose.msra.mxu0 0.0
    %1133 = vmatprep.subr.mxu0 0.0
    %1134 = vmatpush2.xpose.msra.mxu0 0.0
    %1135 = vmatprep.subr.mxu0 0.0
    %1136 = vmatpush2.xpose.msra.mxu0 0.0
    %1137 = vmatprep.subr.mxu0 0.0
    %1138 = vmatpush2.xpose.msra.mxu0 0.0
    %1139 = vmatprep.subr.mxu0 0.0
    %1140 = vmatpush2.xpose.msra.mxu0 0.0
    %1141 = vmatprep.subr.mxu0 0.0
    %1142 = vmatpush2.xpose.msra.mxu0 0.0
    %1143 = vmatprep.subr.mxu0 0.0
    %1144 = vmatpush2.xpose.msra.mxu0 0.0
    %1145 = vmatprep.subr.mxu0 0.0
    %1146 = vmatpush2.xpose.msra.mxu0 0.0
    %1147 = vmatprep.subr.mxu0 0.0
    %1148 = vmatpush2.xpose.msra.mxu0 0.0
    %1149 = vmatprep.subr.mxu0 0.0
    %1150 = vmatpush2.xpose.msra.mxu0 0.0
    %1151 = vmatprep.subr.mxu0 0.0
    %1152 = vmatpush2.xpose.msra.mxu0 0.0
    %1153 = vmatprep.subr.mxu0 0.0
    %1154 = vmatpush2.xpose.msra.mxu0 0.0
    %1155 = vmatprep.mubr.f32.mxu0 0.0
    %1156 = vmatmul.mubr.f32.gmra.mxu0 %v1083
    %v1157 = vpop.f32.mrf.mxu0
    %v1158 = vadd.f32 %v80, %v1157
    %v1159 = vpop.f32.mrf.mxu0
    %1160 = vmatprep.mubr.f32.mxu0 0.0
    %1161 = vmatmul.mubr.f32.gmra.mxu0 %v1085
    %v1162 = vpop.f32.mrf.mxu0
    %v1163 = vadd.f32 %v81, %v1162
    %v1164 = vpop.f32.mrf.mxu0
    %1165 = vdwg.mxu0
    %v1166 = vsel %vm310, %v1158, -inf
    %1167 = vmax.xlane.f32.xlu0 %v1166
    %v1168 = vpop.xlane.xlu0 %1167
    %v1169 = vsel %vm310, %v1163, -inf
    %1170 = vmax.xlane.f32.xlu0 %v1169
    %v1171 = vpop.xlane.xlu0 %1170
    %v1172 = vsub.f32 %v1158, %v1168
    %v1173 = vsub.f32 %v1163, %v1171
    %v1174 = vmul.f32 %v1172, 1.442695
    %v1175 = vpow.pop %v1174
    %v1176 = vmul.f32 %v1173, 1.442695
    %v1177 = vpow.pop %v1176
    %v1178 = vsel %vm310, %v1175, 0.0
    %1179 = vadd.xlane.f32.xlu0 %v1178
    %v1180 = vpop.xlane.xlu0 %1179
    %v1181 = vsel %vm310, %v1177, 0.0
    %1182 = vadd.xlane.f32.xlu0 %v1181
    %v1183 = vpop.xlane.xlu0 %1182
    %v1184 = vrcp.pop %v1180
    %v1185 = vmul.f32 %v1175, %v1184
    %v1186 = vrcp.pop %v1183
    %v1187 = vmul.f32 %v1177, %v1186
    %1188 = vrot.lane.b32.xlu0 %v211, 40
    %v1189 = vpop.permute.xlu0 %1188
    %1190 = vrot.lane.b32.xlu0 %v216, 40
    %v1191 = vpop.permute.xlu0 %1190
    %v1195 = vsel %vm310, %v1185, 0
    %v1198 = vsel %vm310, %v1187, 0
    %1200 = vmatprep.subr.mxu0 0.0
    %1201 = vmatpush1.msra.mxu0 0.0
    %1202 = vmatprep.subr.mxu0 0.0
    %1203 = vmatpush1.msra.mxu0 0.0
    %1204 = vmatprep.subr.mxu0 0.0
    %1205 = vmatpush1.msra.mxu0 0.0
    %1206 = vmatprep.subr.mxu0 0.0
    %1207 = vmatpush1.msra.mxu0 0.0
    %1208 = vmatprep.subr.mxu0 0.0
    %1209 = vmatpush1.msra.mxu0 0.0
    %1210 = vmatprep.subr.mxu0 0.0
    %1211 = vmatpush1.msra.mxu0 0.0
    %1212 = vmatprep.subr.mxu0 0.0
    %1213 = vmatpush1.msra.mxu0 0.0
    %1214 = vmatprep.subr.mxu0 0.0
    %1215 = vmatpush1.msra.mxu0 0.0
    %1216 = vmatprep.subr.mxu0 0.0
    %1217 = vmatpush1.msra.mxu0 0.0
    %1218 = vmatprep.subr.mxu0 0.0
    %1219 = vmatpush1.msra.mxu0 0.0
    %1220 = vmatprep.subr.mxu0 0.0
    %1221 = vmatpush1.msra.mxu0 0.0
    %1222 = vmatprep.subr.mxu0 0.0
    %1223 = vmatpush1.msra.mxu0 0.0
    %1224 = vmatprep.subr.mxu0 0.0
    %1225 = vmatpush1.msra.mxu0 0.0
    %1226 = vmatprep.subr.mxu0 0.0
    %1227 = vmatpush1.msra.mxu0 0.0
    %1228 = vmatprep.subr.mxu0 0.0
    %1229 = vmatpush1.msra.mxu0 %v1191
    %1230 = vmatprep.subr.mxu0 0.0
    %1231 = vmatpush1.msra.mxu0 %v1189
    %1232 = vmatprep.subr.mxu0 0.0
    %1233 = vmatpush2.msra.mxu0 0.0
    %1234 = vmatprep.subr.mxu0 0.0
    %1235 = vmatpush2.msra.mxu0 0.0
    %1236 = vmatprep.subr.mxu0 0.0
    %1237 = vmatpush2.msra.mxu0 0.0
    %1238 = vmatprep.subr.mxu0 0.0
    %1239 = vmatpush2.msra.mxu0 0.0
    %1240 = vmatprep.subr.mxu0 0.0
    %1241 = vmatpush2.msra.mxu0 0.0
    %1242 = vmatprep.subr.mxu0 0.0
    %1243 = vmatpush2.msra.mxu0 0.0
    %1244 = vmatprep.subr.mxu0 0.0
    %1245 = vmatpush2.msra.mxu0 0.0
    %1246 = vmatprep.subr.mxu0 0.0
    %1247 = vmatpush2.msra.mxu0 0.0
    %1248 = vmatprep.subr.mxu0 0.0
    %1249 = vmatpush2.msra.mxu0 0.0
    %1250 = vmatprep.subr.mxu0 0.0
    %1251 = vmatpush2.msra.mxu0 0.0
    %1252 = vmatprep.subr.mxu0 0.0
    %1253 = vmatpush2.msra.mxu0 0.0
    %1254 = vmatprep.subr.mxu0 0.0
    %1255 = vmatpush2.msra.mxu0 0.0
    %1256 = vmatprep.subr.mxu0 0.0
    %1257 = vmatpush2.msra.mxu0 0.0
    %1258 = vmatprep.subr.mxu0 0.0
    %1259 = vmatpush2.msra.mxu0 0.0
    %1260 = vmatprep.subr.mxu0 0.0
    %1261 = vmatpush2.msra.mxu0 0.0
    %1262 = vmatprep.subr.mxu0 0.0
    %1263 = vmatpush2.msra.mxu0 0.0
    %1264 = vmatprep.mubr.f32.mxu0 0.0
    %1265 = vmatmul.mubr.f32.gmra.mxu0 %v1195
    %v1266 = vpop.f32.mrf.mxu0
    %v1267 = vadd.f32 0.0, %v1266
    %v1268 = vpop.f32.mrf.mxu0
    %1269 = vmatprep.mubr.f32.mxu0 0.0
    %1270 = vmatmul.mubr.f32.gmra.mxu0 %v1198
    %v1271 = vpop.f32.mrf.mxu0
    %v1272 = vadd.f32 0.0, %v1271
    %v1273 = vpop.f32.mrf.mxu0
    %1274 = vdwg.mxu0
    %v1276 = vsel %vm226, %v1267, 0
    %v1279 = vsel %vm226, %v1272, 0
    %1281 = vmatprep.subr.mxu0 0.0
    %1282 = vmatpush1.msra.mxu0 0.0
    %1283 = vmatprep.subr.mxu0 0.0
    %1284 = vmatpush1.msra.mxu0 0.0
    %1285 = vmatprep.subr.mxu0 0.0
    %1286 = vmatpush1.msra.mxu0 0.0
    %1287 = vmatprep.subr.mxu0 0.0
    %1288 = vmatpush1.msra.mxu0 0.0
    %1289 = vmatprep.subr.mxu0 0.0
    %1290 = vmatpush1.msra.mxu0 0.0
    %1291 = vmatprep.subr.mxu0 0.0
    %1292 = vmatpush1.msra.mxu0 0.0
    %1293 = vmatprep.subr.mxu0 0.0
    %1294 = vmatpush1.msra.mxu0 0.0
    %1295 = vmatprep.subr.mxu0 0.0
    %1296 = vmatpush1.msra.mxu0 0.0
    %1297 = vmatprep.subr.mxu0 0.0
    %1298 = vmatpush1.msra.mxu0 0.0
    %1299 = vmatprep.subr.mxu0 0.0
    %1300 = vmatpush1.msra.mxu0 0.0
    %1301 = vmatprep.subr.mxu0 0.0
    %1302 = vmatpush1.msra.mxu0 0.0
    %1303 = vmatprep.subr.mxu0 0.0
    %1304 = vmatpush1.msra.mxu0 0.0
    %1305 = vmatprep.subr.mxu0 0.0
    %1306 = vmatpush1.msra.mxu0 0.0
    %1307 = vmatprep.subr.mxu0 0.0
    %1308 = vmatpush1.msra.mxu0 0.0
    %1309 = vmatprep.subr.mxu0 0.0
    %1310 = vmatpush1.msra.mxu0 0.0
    %1311 = vmatprep.subr.mxu0 0.0
    %1312 = vmatpush1.msra.mxu0 %v86
    %1313 = vmatprep.subr.mxu0 0.0
    %1314 = vmatpush2.msra.mxu0 0.0
    %1315 = vmatprep.subr.mxu0 0.0
    %1316 = vmatpush2.msra.mxu0 0.0
    %1317 = vmatprep.subr.mxu0 0.0
    %1318 = vmatpush2.msra.mxu0 0.0
    %1319 = vmatprep.subr.mxu0 0.0
    %1320 = vmatpush2.msra.mxu0 0.0
    %1321 = vmatprep.subr.mxu0 0.0
    %1322 = vmatpush2.msra.mxu0 0.0
    %1323 = vmatprep.subr.mxu0 0.0
    %1324 = vmatpush2.msra.mxu0 0.0
    %1325 = vmatprep.subr.mxu0 0.0
    %1326 = vmatpush2.msra.mxu0 0.0
    %1327 = vmatprep.subr.mxu0 0.0
    %1328 = vmatpush2.msra.mxu0 0.0
    %1329 = vmatprep.subr.mxu0 0.0
    %1330 = vmatpush2.msra.mxu0 0.0
    %1331 = vmatprep.subr.mxu0 0.0
    %1332 = vmatpush2.msra.mxu0 0.0
    %1333 = vmatprep.subr.mxu0 0.0
    %1334 = vmatpush2.msra.mxu0 0.0
    %1335 = vmatprep.subr.mxu0 0.0
    %1336 = vmatpush2.msra.mxu0 0.0
    %1337 = vmatprep.subr.mxu0 0.0
    %1338 = vmatpush2.msra.mxu0 0.0
    %1339 = vmatprep.subr.mxu0 0.0
    %1340 = vmatpush2.msra.mxu0 0.0
    %1341 = vmatprep.subr.mxu0 0.0
    %1342 = vmatpush2.msra.mxu0 0.0
    %1343 = vmatprep.subr.mxu0 0.0
    %1344 = vmatpush2.msra.mxu0 0.0
    %1345 = vmatprep.mubr.f32.mxu0 0.0
    %1346 = vmatmul.mubr.f32.gmra.mxu0 %v1276
    %v1347 = vpop.f32.mrf.mxu0
    %v1348 = vadd.f32 0.0, %v1347
    %v1349 = vpop.f32.mrf.mxu0
    %1350 = vmatprep.mubr.f32.mxu0 0.0
    %1351 = vmatmul.mubr.f32.gmra.mxu0 %v1279
    %v1352 = vpop.f32.mrf.mxu0
    %v1353 = vadd.f32 0.0, %v1352
    %v1354 = vpop.f32.mrf.mxu0
    %1355 = vdwg.mxu0
    %v1356 = vadd.f32 %v1073, %v1348
    %v1357 = vadd.f32 %v1074, %v1353
    %v1358 = vadd.f32 %v78, %v1356
    %v1359 = vadd.f32 %v79, %v1357
    %v1360 = vsel %vm87, %v1358, 0.0
    %1361 = vadd.xlane.f32.xlu0 %v1360
    %v1362 = vpop.xlane.xlu0 %1361
    %v1363 = vsel %vm87, %v1359, 0.0
    %1364 = vadd.xlane.f32.xlu0 %v1363
    %v1365 = vpop.xlane.xlu0 %1364
    %v1366 = vmul.f32 %v1362, %v94
    %v1367 = vmul.f32 %v1365, %v94
    %v1368 = vsub.f32 %v1358, %v1366
    %v1369 = vsub.f32 %v1359, %v1367
    %v1370 = vmul.f32 %v1368, %v1368
    %v1371 = vmul.f32 %v1369, %v1369
    %v1372 = vsel %vm87, %v1370, 0.0
    %1373 = vadd.xlane.f32.xlu0 %v1372
    %v1374 = vpop.xlane.xlu0 %1373
    %v1375 = vsel %vm87, %v1371, 0.0
    %1376 = vadd.xlane.f32.xlu0 %v1375
    %v1377 = vpop.xlane.xlu0 %1376
    %v1378 = vmul.f32 %v1374, %v94
    %v1379 = vmul.f32 %v1377, %v94
    %v1380 = vadd.f32 %v1378, 1e-05
    %v1381 = vadd.f32 %v1379, 1e-05
    %v1382 = vrsqrt.pop %v1380
    %v1383 = vrsqrt.pop %v1381
    %v1384 = vmul.f32 %v1368, %v1382
    %v1385 = vmul.f32 %v1369, %v1383
    %v1386 = vlaneseq
    %v1387 = vshrl.u32 %v1386, 7
    %v1388 = vsub.s32 2, %v1387
    %v1389 = vrot.slane %v82, %v1388
    %v1390 = vmul.f32 %v1384, %v1389
    %v1391 = vmul.f32 %v1385, %v1389
    %v1392 = vlaneseq
    %v1393 = vshrl.u32 %v1392, 7
    %v1394 = vsub.s32 3, %v1393
    %v1395 = vrot.slane %v82, %v1394
    %v1396 = vadd.f32 %v1390, %v1395
    %v1397 = vadd.f32 %v1391, %v1395
    %v1398 = vld [vmem:[%s7] sm:$0xff]
    %v1399 = vld [vmem:[%s7 + $0x8] sm:$0xff]
    %v1400 = vld [vmem:[%s7 + $0x10] sm:$0xff]
    %v1401 = vld [vmem:[%s7 + $0x18] sm:$0xff]
    %v1402 = vld [vmem:[%s8] sm:$0x1]
    %v1404 = vlaneseq
    %v1405 = vshrl.u32 %v1404, 7
    %v1406 = vsub.s32 0, %v1405
    %v1407 = vrot.slane %v1402, %v1406
    %v1410 = vsel %vm87, %v1396, 0
    %v1413 = vsel %vm87, %v1397, 0
    %1415 = vmatprep.subr.mxu0 0.0
    %1416 = vmatpush1.msra.mxu0 0.0
    %1417 = vmatprep.subr.mxu0 0.0
    %1418 = vmatpush1.msra.mxu0 0.0
    %1419 = vmatprep.subr.mxu0 0.0
    %1420 = vmatpush1.msra.mxu0 0.0
    %1421 = vmatprep.subr.mxu0 0.0
    %1422 = vmatpush1.msra.mxu0 0.0
    %1423 = vmatprep.subr.mxu0 0.0
    %1424 = vmatpush1.msra.mxu0 0.0
    %1425 = vmatprep.subr.mxu0 0.0
    %1426 = vmatpush1.msra.mxu0 0.0
    %1427 = vmatprep.subr.mxu0 0.0
    %1428 = vmatpush1.msra.mxu0 0.0
    %1429 = vmatprep.subr.mxu0 0.0
    %1430 = vmatpush1.msra.mxu0 0.0
    %1431 = vmatprep.subr.mxu0 0.0
    %1432 = vmatpush1.msra.mxu0 0.0
    %1433 = vmatprep.subr.mxu0 0.0
    %1434 = vmatpush1.msra.mxu0 0.0
    %1435 = vmatprep.subr.mxu0 0.0
    %1436 = vmatpush1.msra.mxu0 0.0
    %1437 = vmatprep.subr.mxu0 0.0
    %1438 = vmatpush1.msra.mxu0 0.0
    %1439 = vmatprep.subr.mxu0 0.0
    %1440 = vmatpush1.msra.mxu0 %v1401
    %1441 = vmatprep.subr.mxu0 0.0
    %1442 = vmatpush1.msra.mxu0 %v1400
    %1443 = vmatprep.subr.mxu0 0.0
    %1444 = vmatpush1.msra.mxu0 %v1399
    %1445 = vmatprep.subr.mxu0 0.0
    %1446 = vmatpush1.msra.mxu0 %v1398
    %1447 = vmatprep.subr.mxu0 0.0
    %1448 = vmatpush2.msra.mxu0 0.0
    %1449 = vmatprep.subr.mxu0 0.0
    %1450 = vmatpush2.msra.mxu0 0.0
    %1451 = vmatprep.subr.mxu0 0.0
    %1452 = vmatpush2.msra.mxu0 0.0
    %1453 = vmatprep.subr.mxu0 0.0
    %1454 = vmatpush2.msra.mxu0 0.0
    %1455 = vmatprep.subr.mxu0 0.0
    %1456 = vmatpush2.msra.mxu0 0.0
    %1457 = vmatprep.subr.mxu0 0.0
    %1458 = vmatpush2.msra.mxu0 0.0
    %1459 = vmatprep.subr.mxu0 0.0
    %1460 = vmatpush2.msra.mxu0 0.0
    %1461 = vmatprep.subr.mxu0 0.0
    %1462 = vmatpush2.msra.mxu0 0.0
    %1463 = vmatprep.subr.mxu0 0.0
    %1464 = vmatpush2.msra.mxu0 0.0
    %1465 = vmatprep.subr.mxu0 0.0
    %1466 = vmatpush2.msra.mxu0 0.0
    %1467 = vmatprep.subr.mxu0 0.0
    %1468 = vmatpush2.msra.mxu0 0.0
    %1469 = vmatprep.subr.mxu0 0.0
    %1470 = vmatpush2.msra.mxu0 0.0
    %1471 = vmatprep.subr.mxu0 0.0
    %1472 = vmatpush2.msra.mxu0 0.0
    %1473 = vmatprep.subr.mxu0 0.0
    %1474 = vmatpush2.msra.mxu0 0.0
    %1475 = vmatprep.subr.mxu0 0.0
    %1476 = vmatpush2.msra.mxu0 0.0
    %1477 = vmatprep.subr.mxu0 0.0
    %1478 = vmatpush2.msra.mxu0 0.0
    %1479 = vmatprep.mubr.f32.mxu0 0.0
    %1480 = vmatmul.mubr.f32.gmra.mxu0 %v1410
    %v1481 = vpop.f32.mrf.mxu0
    %v1482 = vadd.f32 %v1407, %v1481
    %v1483 = vpop.f32.mrf.mxu0
    %1484 = vmatprep.mubr.f32.mxu0 0.0
    %1485 = vmatmul.mubr.f32.gmra.mxu0 %v1413
    %v1486 = vpop.f32.mrf.mxu0
    %v1487 = vadd.f32 %v1407, %v1486
    %v1488 = vpop.f32.mrf.mxu0
    %1489 = vdwg.mxu0
    %v1490 = vmax.f32 %v1482, 0.0
    %v1491 = vmax.f32 %v1487, 0.0
    %v1492 = vld [vmem:[%s9] sm:$0xff]
    %v1493 = vld [vmem:[%s9 + $0x8] sm:$0xff]
    %v1494 = vld [vmem:[%s9 + $0x10] sm:$0xff]
    %v1495 = vld [vmem:[%s9 + $0x18] sm:$0xff]
    %v1496 = vld [vmem:[%s9 + $0x20] sm:$0xff]
    %v1497 = vld [vmem:[%s9 + $0x28] sm:$0xff]
    %v1498 = vld [vmem:[%s9 + $0x30] sm:$0xff]
    %v1499 = vld [vmem:[%s9 + $0x38] sm:$0xff]
    %v1500 = vld [vmem:[%s10] sm:$0x1]
    %v1502 = vlaneseq
    %v1503 = vshrl.u32 %v1502, 7
    %v1504 = vsub.s32 0, %v1503
    %v1505 = vrot.slane %v1500, %v1504
    %vm1507 = vcmask 523264
    %v1509 = vsel %vm1507, %v1490, 0
    %v1512 = vsel %vm1507, %v1491, 0
    %1514 = vmatprep.subr.mxu0 0.0
    %1515 = vmatpush1.msra.mxu0 0.0
    %1516 = vmatprep.subr.mxu0 0.0
    %1517 = vmatpush1.msra.mxu0 0.0
    %1518 = vmatprep.subr.mxu0 0.0
    %1519 = vmatpush1.msra.mxu0 0.0
    %1520 = vmatprep.subr.mxu0 0.0
    %1521 = vmatpush1.msra.mxu0 0.0
    %1522 = vmatprep.subr.mxu0 0.0
    %1523 = vmatpush1.msra.mxu0 0.0
    %1524 = vmatprep.subr.mxu0 0.0
    %1525 = vmatpush1.msra.mxu0 0.0
    %1526 = vmatprep.subr.mxu0 0.0
    %1527 = vmatpush1.msra.mxu0 0.0
    %1528 = vmatprep.subr.mxu0 0.0
    %1529 = vmatpush1.msra.mxu0 0.0
    %1530 = vmatprep.subr.mxu0 0.0
    %1531 = vmatpush1.msra.mxu0 %v1499
    %1532 = vmatprep.subr.mxu0 0.0
    %1533 = vmatpush1.msra.mxu0 %v1498
    %1534 = vmatprep.subr.mxu0 0.0
    %1535 = vmatpush1.msra.mxu0 %v1497
    %1536 = vmatprep.subr.mxu0 0.0
    %1537 = vmatpush1.msra.mxu0 %v1496
    %1538 = vmatprep.subr.mxu0 0.0
    %1539 = vmatpush1.msra.mxu0 %v1495
    %1540 = vmatprep.subr.mxu0 0.0
    %1541 = vmatpush1.msra.mxu0 %v1494
    %1542 = vmatprep.subr.mxu0 0.0
    %1543 = vmatpush1.msra.mxu0 %v1493
    %1544 = vmatprep.subr.mxu0 0.0
    %1545 = vmatpush1.msra.mxu0 %v1492
    %1546 = vmatprep.subr.mxu0 0.0
    %1547 = vmatpush2.msra.mxu0 0.0
    %1548 = vmatprep.subr.mxu0 0.0
    %1549 = vmatpush2.msra.mxu0 0.0
    %1550 = vmatprep.subr.mxu0 0.0
    %1551 = vmatpush2.msra.mxu0 0.0
    %1552 = vmatprep.subr.mxu0 0.0
    %1553 = vmatpush2.msra.mxu0 0.0
    %1554 = vmatprep.subr.mxu0 0.0
    %1555 = vmatpush2.msra.mxu0 0.0
    %1556 = vmatprep.subr.mxu0 0.0
    %1557 = vmatpush2.msra.mxu0 0.0
    %1558 = vmatprep.subr.mxu0 0.0
    %1559 = vmatpush2.msra.mxu0 0.0
    %1560 = vmatprep.subr.mxu0 0.0
    %1561 = vmatpush2.msra.mxu0 0.0
    %1562 = vmatprep.subr.mxu0 0.0
    %1563 = vmatpush2.msra.mxu0 0.0
    %1564 = vmatprep.subr.mxu0 0.0
    %1565 = vmatpush2.msra.mxu0 0.0
    %1566 = vmatprep.subr.mxu0 0.0
    %1567 = vmatpush2.msra.mxu0 0.0
    %1568 = vmatprep.subr.mxu0 0.0
    %1569 = vmatpush2.msra.mxu0 0.0
    %1570 = vmatprep.subr.mxu0 0.0
    %1571 = vmatpush2.msra.mxu0 0.0
    %1572 = vmatprep.subr.mxu0 0.0
    %1573 = vmatpush2.msra.mxu0 0.0
    %1574 = vmatprep.subr.mxu0 0.0
    %1575 = vmatpush2.msra.mxu0 0.0
    %1576 = vmatprep.subr.mxu0 0.0
    %1577 = vmatpush2.msra.mxu0 0.0
    %1578 = vmatprep.mubr.f32.mxu0 0.0
    %1579 = vmatmul.mubr.f32.gmra.mxu0 %v1509
    %v1580 = vpop.f32.mrf.mxu0
    %v1581 = vadd.f32 %v1505, %v1580
    %v1582 = vpop.f32.mrf.mxu0
    %1583 = vmatprep.mubr.f32.mxu0 0.0
    %1584 = vmatmul.mubr.f32.gmra.mxu0 %v1512
    %v1585 = vpop.f32.mrf.mxu0
    %v1586 = vadd.f32 %v1505, %v1585
    %v1587 = vpop.f32.mrf.mxu0
    %1588 = vdwg.mxu0
    %v1589 = vadd.f32 %v1358, %v1581
    %v1590 = vadd.f32 %v1359, %v1586
    %1591 = vst.msk [vmem:[#allocation8] sm:$0xff] %vm87, %v1589
    %1592 = vst.msk [vmem:[#allocation8 + $0x8] sm:$0xff] %vm87, %v1590
    // Predicated region
    $region58: #{tpu_custom_call.1} parent=1 // pred_check
      _
    $region59: #{tpu_custom_call.1} parent=1 // pred_check_branch
      %1594 = sbr.rel (0) target = $region61
    $region60: #{tpu_custom_call.1} parent=1 // pred_region
      %s1596 = ssub.s32 256, 256
      %1597 = vsyncadd [#allocation4], %s1596
      %s1598 = sshll.u32 [#allocation8], 4
      %s1599 = int_to_ptr.vmem [resolvable:$true] %s1598
      %1604 = dma.vmem_to_hbm [thread:$0]  %s1599, 256, %s11, [#allocation4], 128, 128, 8
    $region61: #{tpu_custom_call.1} parent=1 // pred_fallthru
      _
    // Predicated region
    $region62: #{tpu_custom_call.1} parent=1 // pred_check
      _
    $region63: #{tpu_custom_call.1} parent=1 // pred_check_branch
      %1606 = sbr.rel (0) target = $region65
    $region64: #{tpu_custom_call.1} parent=1 // pred_region
      %1607 = dma.done [#allocation4], 256
    $region65: #{tpu_custom_call.1} parent=1 // pred_fallthru
      _
    %1608 = vsyncpa [#allocation3], 1
    %1609 = vsyncpa [#allocation6], 1
    %1610 = vsyncpa [#allocation4], 1

</llo_original>
